<compile_context>
chip_gen: v6e
topology: v6e:2x2x1
jax: 0.10.0
libtpu: 0.0.40
codegen_flags: <defaults>
</compile_context>

<pallas_src>
import math
from functools import partial

import numpy as np
import jax
import jax.numpy as jnp
from jax.experimental import pallas as pl
from jax.experimental.pallas import tpu as pltpu

# ---------------- Config (consistent with the module) ------------------------
D_MODEL = 32
N_HEADS = 4
IS_CAUSAL = True
# dropout = 0.0 -> identity (inference semantics)


# ---------------- Pallas kernel ----------------------------------------------
def self_attention_kernel(x_ref, wqkv_ref, bqkv_ref, wo_ref, bo_ref, bias_ref,
                          o_ref, *, n_heads):
    M, D = x_ref.shape
    H = n_heads
    E = D // H

    x = x_ref[...]                                              # (M, D)

    # Fused qkv projection: one lane-dense (M,D)x(D,3D) MXU push.
    # 1/sqrt(head_dim) is already folded into the q columns / bias.
    qkv = jnp.dot(x, wqkv_ref[...],
                  preferred_element_type=jnp.float32) + bqkv_ref[...]  # (M, 3D)

    # Split into heads ONCE: (M, 3H, E) -> (3H, M, E); slice q/k/v on axis 0.
    qkv_h = jnp.transpose(qkv.reshape(M, 3 * H, E), (1, 0, 2))
    q = qkv_h[0:H]                                              # (H, M, E)
    k = qkv_h[H:2 * H]                                          # (H, M, E)
    v = qkv_h[2 * H:3 * H]                                      # (H, M, E)

    # Head-batched scores + precomputed block-diagonal/causal additive bias.
    s = jnp.einsum('hme,hne->hmn', q, k,
                   preferred_element_type=jnp.float32)          # (H, M, M)
    s = s + bias_ref[...][None]

    # Numerically stable softmax; divide goes to the EUP reciprocal slot.
    s = s - jnp.max(s, axis=-1, keepdims=True)
    p = jnp.exp(s)
    p = p * pl.reciprocal(jnp.sum(p, axis=-1, keepdims=True), approx=True)
    # TODO(synk): attn_dropout is identity (inference, p = 0).

    av = jnp.einsum('hmn,hne->hme', p, v,
                    preferred_element_type=jnp.float32)          # (H, M, E)

    # merge_heads + out_proj: one small transpose, one (M,D)x(D,D) matmul.
    av_m = jnp.transpose(av, (1, 0, 2)).reshape(M, H * E)        # (M, D)
    out = jnp.dot(av_m, wo_ref[...],
                  preferred_element_type=jnp.float32) + bo_ref[...]
    # TODO(synk): out_dropout is identity (inference, p = 0).
    o_ref[...] = out                                             # (M, D)


# ---------------- static mask bias (wrapper-side constant) --------------------
def build_mask_bias(B, L, is_causal):
    """Additive bias over flattened rows: 0 where attention is allowed,
    -1e30 elsewhere (cross-batch and, if causal, future positions)."""
    M = B * L
    row = np.arange(M)[:, None]
    col = np.arange(M)[None, :]
    same_batch = (row // L) == (col // L)
    mask = np.logical_and(same_batch, row >= col) if is_causal else same_batch
    return jnp.asarray(np.where(mask, 0.0, -1e30), dtype=jnp.float32)


# ---------------- pallas_call wrapper -----------------------------------------
def self_attention_pallas(x, kparams, *, n_heads=N_HEADS, is_causal=IS_CAUSAL):
    B, L, D = x.shape
    M = B * L
    x_flat = x.reshape(M, D)                      # wrapper-side reshape (free)
    bias = build_mask_bias(B, L, is_causal)       # (M, M) compile-time constant

    args = (x_flat, kparams["wqkv"], kparams["bqkv"],
            kparams["wo_t"], kparams["bo"], bias)
    vmem = lambda: pl.BlockSpec(memory_space=pltpu.MemorySpace.VMEM)

    out_flat = pl.pallas_call(
        partial(self_attention_kernel, n_heads=n_heads),
        out_shape=jax.ShapeDtypeStruct((M, D), jnp.float32),
        in_specs=[vmem() for _ in args],
        out_specs=vmem(),
    )(*args)
    return out_flat.reshape(B, L, D)


# ---------------- parameter prep (wrapper-side, zero-cost) ---------------------
def prepare_kernel_params(wqkv_t, bqkv, wo_t, bo, *, n_heads, d_model):
    """wqkv_t: (D, 3D) = qkv_proj.weight.T, bqkv: (3D,),
       wo_t: (D, D) = out_proj.weight.T,    bo: (D,).
       Packs [wq*scale | wk | wv] so the kernel does one fused qkv matmul."""
    E = d_model // n_heads
    scale = 1.0 / math.sqrt(E)                    # q.size(-1) after split_heads
    col_scale = jnp.concatenate(
        [jnp.full((d_model,), scale, jnp.float32),
         jnp.ones((2 * d_model,), jnp.float32)])
    return {
        "wqkv": wqkv_t * col_scale[None, :],      # (D, 3D), q columns pre-scaled
        "bqkv": (bqkv * col_scale).reshape(1, 3 * d_model),
        "wo_t": wo_t,                             # (D, D)
        "bo": bo.reshape(1, d_model),
    }


# ---------------- pure-JAX reference (mirrors the PyTorch forward) -------------
def ref_self_attention(x, wqkv_t, bqkv, wo_t, bo, *, n_heads, is_causal):
    B, L, D = x.shape
    E = D // n_heads
    qkv = x @ wqkv_t + bqkv
    q, k, v = jnp.split(qkv, 3, axis=-1)
    split = lambda t: t.reshape(B, L, n_heads, E)
    qh, kh, vh = split(q), split(k), split(v)
    s = jnp.einsum('blhe,bmhe->bhlm', qh, kh) / math.sqrt(E)
    if is_causal:
        m = jnp.tril(jnp.ones((L, L), bool))
        s = jnp.where(m[None, None], s, -jnp.inf)
    a = jax.nn.softmax(s, axis=-1)
    attn = jnp.einsum('bhlm,bmhe->blhe', a, vh).reshape(B, L, D)
    return attn @ wo_t + bo


# ---------------- deterministic init -------------------------------------------
def init_torch_params(key, d_model):
    k1, k2, k3, k4 = jax.random.split(key, 4)
    wqkv_t = jax.random.normal(k1, (d_model, 3 * d_model), jnp.float32) * 0.1
    bqkv = jax.random.normal(k2, (3 * d_model,), jnp.float32) * 0.1
    wo_t = jax.random.normal(k3, (d_model, d_model), jnp.float32) * 0.1
    bo = jax.random.normal(k4, (d_model,), jnp.float32) * 0.1
    return wqkv_t, bqkv, wo_t, bo


# ---------------- main ----------------------------------------------------------
if __name__ == "__main__":
    key = jax.random.PRNGKey(0)
    k_param, k_x = jax.random.split(key)
    wqkv_t, bqkv, wo_t, bo = init_torch_params(k_param, D_MODEL)
    kparams = prepare_kernel_params(wqkv_t, bqkv, wo_t, bo,
                                    n_heads=N_HEADS, d_model=D_MODEL)

    B, L = 2, 8
    x = jax.random.normal(k_x, (B, L, D_MODEL), jnp.float32)

    out = self_attention_pallas(x, kparams)
    out = jax.block_until_ready(out)

    ref = ref_self_attention(x, wqkv_t, bqkv, wo_t, bo,
                             n_heads=N_HEADS, is_causal=IS_CAUSAL)
    assert out.shape == (B, L, D_MODEL)
    max_err = float(jnp.max(jnp.abs(out - ref)))
    assert jnp.allclose(out, ref, atol=2e-3, rtol=2e-3), max_err

    print("KERNEL_OK")
</pallas_src>

<mosaic_0001>
module attributes {stable_mosaic.version = 11 : i64} {
  func.func @self_attention_kernel(%arg0: memref<16x32xf32, #tpu.memory_space<vmem>>, %arg1: memref<32x96xf32, #tpu.memory_space<vmem>>, %arg2: memref<1x96xf32, #tpu.memory_space<vmem>>, %arg3: memref<32x32xf32, #tpu.memory_space<vmem>>, %arg4: memref<1x32xf32, #tpu.memory_space<vmem>>, %arg5: memref<16x16xf32, #tpu.memory_space<vmem>>, %arg6: memref<16x32xf32, #tpu.memory_space<vmem>>) attributes {dimension_semantics = [], scalar_prefetch = 0 : i64, scratch_operands = 0 : i64, tpu.core_type = #tpu.core_type<tc>} {
    %c0 = arith.constant 0 : index
    %c0_0 = arith.constant 0 : index
    %0 = vector.load %arg0[%c0, %c0_0] : memref<16x32xf32, #tpu.memory_space<vmem>>, vector<16x32xf32>
    %c0_1 = arith.constant 0 : index
    %c0_2 = arith.constant 0 : index
    %1 = vector.load %arg1[%c0_1, %c0_2] : memref<32x96xf32, #tpu.memory_space<vmem>>, vector<32x96xf32>
    %cst = arith.constant dense<0.000000e+00> : vector<16x96xf32>
    %2 = tpu.matmul %0, %1, %cst {dimension_numbers = #tpu.dot_dimension_numbers<[1], [0], [0], [1], [0, 0, 1, 1], [], []>} : vector<16x32xf32>, vector<32x96xf32>, vector<16x96xf32> -> vector<16x96xf32>
    %c0_3 = arith.constant 0 : index
    %c0_4 = arith.constant 0 : index
    %3 = vector.load %arg2[%c0_3, %c0_4] : memref<1x96xf32, #tpu.memory_space<vmem>>, vector<1x96xf32>
    %4 = vector.broadcast %3 : vector<1x96xf32> to vector<16x96xf32>
    %5 = arith.addf %2, %4 : vector<16x96xf32>
    %6 = vector.shape_cast %5 : vector<16x96xf32> to vector<16x12x8xf32>
    %7 = tpu.transpose %6, [1, 0, 2] : vector<16x12x8xf32> -> vector<12x16x8xf32>
    %8 = vector.extract_strided_slice %7 {offsets = [0, 0, 0], sizes = [4, 16, 8], strides = [1, 1, 1]} : vector<12x16x8xf32> to vector<4x16x8xf32>
    %9 = vector.extract_strided_slice %7 {offsets = [4, 0, 0], sizes = [4, 16, 8], strides = [1, 1, 1]} : vector<12x16x8xf32> to vector<4x16x8xf32>
    %10 = vector.extract_strided_slice %7 {offsets = [8, 0, 0], sizes = [4, 16, 8], strides = [1, 1, 1]} : vector<12x16x8xf32> to vector<4x16x8xf32>
    "tpu.trace_start"() <{level = 10 : i32, message = "hme,hne->hmn"}> : () -> ()
    %cst_5 = arith.constant dense<0.000000e+00> : vector<4x16x16xf32>
    %11 = tpu.matmul %8, %9, %cst_5 {dimension_numbers = #tpu.dot_dimension_numbers<[2], [2], [1], [1], [0, 0, 0, 1, 1, 1], [0], [0]>} : vector<4x16x8xf32>, vector<4x16x8xf32>, vector<4x16x16xf32> -> vector<4x16x16xf32>
    "tpu.trace_stop"() : () -> ()
    %c0_6 = arith.constant 0 : index
    %c0_7 = arith.constant 0 : index
    %12 = vector.load %arg5[%c0_6, %c0_7] : memref<16x16xf32, #tpu.memory_space<vmem>>, vector<16x16xf32>
    %13 = vector.shape_cast %12 : vector<16x16xf32> to vector<1x16x16xf32>
    %14 = vector.broadcast %13 : vector<1x16x16xf32> to vector<4x16x16xf32>
    %15 = arith.addf %11, %14 : vector<4x16x16xf32>
    %cst_8 = arith.constant dense<0xFF800000> : vector<4x16xf32>
    %16 = vector.multi_reduction <maximumf>, %15, %cst_8 [2] : vector<4x16x16xf32> to vector<4x16xf32>
    %17 = vector.shape_cast %16 : vector<4x16xf32> to vector<4x16x1xf32>
    %18 = vector.broadcast %17 : vector<4x16x1xf32> to vector<4x16x16xf32>
    %19 = arith.subf %15, %18 : vector<4x16x16xf32>
    %20 = math.exp %19 : vector<4x16x16xf32>
    %cst_9 = arith.constant dense<0.000000e+00> : vector<4x16xf32>
    %21 = vector.multi_reduction <add>, %20, %cst_9 [2] : vector<4x16x16xf32> to vector<4x16xf32>
    %22 = vector.shape_cast %21 : vector<4x16xf32> to vector<4x16x1xf32>
    %23 = tpu.reciprocal %22 {approx = true} : vector<4x16x1xf32> -> vector<4x16x1xf32>
    %24 = vector.broadcast %23 : vector<4x16x1xf32> to vector<4x16x16xf32>
    %25 = arith.mulf %20, %24 : vector<4x16x16xf32>
    "tpu.trace_start"() <{level = 10 : i32, message = "hmn,hne->hme"}> : () -> ()
    %cst_10 = arith.constant dense<0.000000e+00> : vector<4x16x8xf32>
    %26 = tpu.matmul %25, %10, %cst_10 {dimension_numbers = #tpu.dot_dimension_numbers<[2], [1], [1], [2], [0, 0, 0, 1, 1, 2], [0], [0]>} : vector<4x16x16xf32>, vector<4x16x8xf32>, vector<4x16x8xf32> -> vector<4x16x8xf32>
    "tpu.trace_stop"() : () -> ()
    %27 = tpu.transpose %26, [1, 0, 2] : vector<4x16x8xf32> -> vector<16x4x8xf32>
    %28 = vector.shape_cast %27 : vector<16x4x8xf32> to vector<16x32xf32>
    %c0_11 = arith.constant 0 : index
    %c0_12 = arith.constant 0 : index
    %29 = vector.load %arg3[%c0_11, %c0_12] : memref<32x32xf32, #tpu.memory_space<vmem>>, vector<32x32xf32>
    %cst_13 = arith.constant dense<0.000000e+00> : vector<16x32xf32>
    %30 = tpu.matmul %28, %29, %cst_13 {dimension_numbers = #tpu.dot_dimension_numbers<[1], [0], [0], [1], [0, 0, 1, 1], [], []>} : vector<16x32xf32>, vector<32x32xf32>, vector<16x32xf32> -> vector<16x32xf32>
    %c0_14 = arith.constant 0 : index
    %c0_15 = arith.constant 0 : index
    %31 = vector.load %arg4[%c0_14, %c0_15] : memref<1x32xf32, #tpu.memory_space<vmem>>, vector<1x32xf32>
    %32 = vector.broadcast %31 : vector<1x32xf32> to vector<16x32xf32>
    %33 = arith.addf %30, %32 : vector<16x32xf32>
    %c0_16 = arith.constant 0 : index
    %c0_17 = arith.constant 0 : index
    %34 = vector.load %arg6[%c0_16, %c0_17] : memref<16x32xf32, #tpu.memory_space<vmem>>, vector<16x32xf32>
    tpu.vector_store %arg6[%c0_16, %c0_17], %33 {strides = array<i32>} : memref<16x32xf32, #tpu.memory_space<vmem>>, vector<16x32xf32>,
    return
  }
}

</mosaic_0001>

<llo_original>
// kernel: tpu_custom_call.1
$region0: #{tpu_custom_call.1}
  #allocation0 [shape = 'u32[]', space=smem, size = 0x4, offset = 0x4, fixed_abs, tag = 'smem constant byte address 0x4 - core index']
  #allocation1 [shape = 'u32[144,128]{1,0:T(1,128)}', space=vmem, size = 0x12000, scoped, tag = 'internal scratch']
  %s0 = inlined_call_operand.hbm [shape: f32[16,32], index: 0, kind: input, shape index: {}]
  %s1 = inlined_call_operand.hbm [shape: f32[32,96], index: 1, kind: input, shape index: {}]
  %s2 = inlined_call_operand.vmem [shape: f32[1,96], index: 2, kind: input, shape index: {}]
  %s3 = inlined_call_operand.hbm [shape: f32[32,32], index: 3, kind: input, shape index: {}]
  %s4 = inlined_call_operand.vmem [shape: f32[1,32], index: 4, kind: input, shape index: {}]
  %s5 = inlined_call_operand.hbm [shape: f32[16,16], index: 5, kind: input, shape index: {}]
  %s6 = inlined_call_operand.hbm [shape: f32[16,32], index: 6, kind: output, shape index: {}]
  %s7 = sld [smem:[#allocation0]]
  $region50: #{tpu_custom_call.1} parent=0
    _
  %s9 = ssub.s32 1, %s7
  %s10 = scalar_select 0, %s9, %s7
  $region1: #{tpu_custom_call.1} parent=0
    #allocation2 [shape = 'u8[8192]{0}', space=vmem, size = 0x2000, scoped, tag = 'input window, operand 0, single buffered']
    #allocation3 [shape = 's32[1]{0}', space=sflag, size = 0x4, scoped, tag = 'scoped memory for tpu_custom_call.1']
    #allocation4 [shape = 's32[1]{0}', space=sflag, size = 0x4, scoped, tag = 'scoped memory for tpu_custom_call.1']
    #allocation5 [shape = 'u8[16384]{0}', space=vmem, size = 0x4000, scoped, tag = 'input window, operand 1, single buffered']
    #allocation6 [shape = 's32[1]{0}', space=sflag, size = 0x4, scoped, tag = 'scoped memory for tpu_custom_call.1']
    #allocation7 [shape = 'u8[16384]{0}', space=vmem, size = 0x4000, scoped, tag = 'input window, operand 3, single buffered']
    #allocation8 [shape = 'u8[8192]{0}', space=vmem, size = 0x2000, scoped, tag = 'input window, operand 5, single buffered']
    #allocation9 [shape = 's32[1]{0}', space=sflag, size = 0x4, scoped, tag = 'scoped memory for tpu_custom_call.1']
    #allocation10 [shape = 'u8[8192]{0}', space=vmem, size = 0x2000, scoped, tag = 'output window, operand 0, single buffered']
    %11 = vsyncpa [#allocation3], 0
    %12 = vsyncpa [#allocation6], 0
    %13 = vsyncpa [#allocation9], 0
    %14 = vsyncpa [#allocation4], 0
    // Predicated region
    $region2: #{tpu_custom_call.1} parent=1 // pred_check
      _
    $region3: #{tpu_custom_call.1} parent=1 // pred_check_branch
      %16 = sbr.rel (0) target = $region5
    $region4: #{tpu_custom_call.1} parent=1 // pred_region
      %s18 = ssub.s32 256, 256
      %19 = vsyncadd [#allocation3], %s18
      %s20 = sshll.u32 [#allocation2], 4
      %s21 = int_to_ptr.vmem [resolvable:$true] %s20
      %26 = dma.hbm_to_vmem [thread:$0]  %s0, 256, %s21, [#allocation3], 128, 128, 8
    $region5: #{tpu_custom_call.1} parent=1 // pred_fallthru
      _
    // Predicated region
    $region6: #{tpu_custom_call.1} parent=1 // pred_check
      _
    $region7: #{tpu_custom_call.1} parent=1 // pred_check_branch
      %28 = sbr.rel (0) target = $region9
    $region8: #{tpu_custom_call.1} parent=1 // pred_region
      %s30 = ssub.s32 512, 512
      %31 = vsyncadd [#allocation6], %s30
      %s32 = sshll.u32 [#allocation5], 4
      %s33 = int_to_ptr.vmem [resolvable:$true] %s32
      %38 = dma.hbm_to_vmem [thread:$0]  %s1, 512, %s33, [#allocation6], 128, 128, 8
    $region9: #{tpu_custom_call.1} parent=1 // pred_fallthru
      _
    // Predicated region
    $region10: #{tpu_custom_call.1} parent=1 // pred_check
      _
    $region11: #{tpu_custom_call.1} parent=1 // pred_check_branch
      %40 = sbr.rel (0) target = $region13
    $region12: #{tpu_custom_call.1} parent=1 // pred_region
      _
    $region13: #{tpu_custom_call.1} parent=1 // pred_fallthru
      _
    // Predicated region
    $region14: #{tpu_custom_call.1} parent=1 // pred_check
      _
    $region15: #{tpu_custom_call.1} parent=1 // pred_check_branch
      %42 = sbr.rel (0) target = $region17
    $region16: #{tpu_custom_call.1} parent=1 // pred_region
      %s44 = ssub.s32 512, 512
      %45 = vsyncadd [#allocation6], %s44
      %s46 = sshll.u32 [#allocation7], 4
      %s47 = int_to_ptr.vmem [resolvable:$true] %s46
      %52 = dma.hbm_to_vmem [thread:$0]  %s3, 512, %s47, [#allocation6], 128, 128, 8
    $region17: #{tpu_custom_call.1} parent=1 // pred_fallthru
      _
    // Predicated region
    $region18: #{tpu_custom_call.1} parent=1 // pred_check
      _
    $region19: #{tpu_custom_call.1} parent=1 // pred_check_branch
      %54 = sbr.rel (0) target = $region21
    $region20: #{tpu_custom_call.1} parent=1 // pred_region
      _
    $region21: #{tpu_custom_call.1} parent=1 // pred_fallthru
      _
    // Predicated region
    $region22: #{tpu_custom_call.1} parent=1 // pred_check
      _
    $region23: #{tpu_custom_call.1} parent=1 // pred_check_branch
      %56 = sbr.rel (0) target = $region25
    $region24: #{tpu_custom_call.1} parent=1 // pred_region
      %s58 = ssub.s32 256, 256
      %59 = vsyncadd [#allocation9], %s58
      %s60 = sshll.u32 [#allocation8], 4
      %s61 = int_to_ptr.vmem [resolvable:$true] %s60
      %66 = dma.hbm_to_vmem [thread:$0]  %s5, 256, %s61, [#allocation9], 128, 128, 8
    $region25: #{tpu_custom_call.1} parent=1 // pred_fallthru
      _
    // Predicated region
    $region26: #{tpu_custom_call.1} parent=1 // pred_check
      _
    $region27: #{tpu_custom_call.1} parent=1 // pred_check_branch
      %68 = sbr.rel (0) target = $region29
    $region28: #{tpu_custom_call.1} parent=1 // pred_region
      %69 = dma.done [#allocation3], 256
    $region29: #{tpu_custom_call.1} parent=1 // pred_fallthru
      _
    // Predicated region
    $region30: #{tpu_custom_call.1} parent=1 // pred_check
      _
    $region31: #{tpu_custom_call.1} parent=1 // pred_check_branch
      %71 = sbr.rel (0) target = $region33
    $region32: #{tpu_custom_call.1} parent=1 // pred_region
      %72 = dma.done [#allocation6], 512
    $region33: #{tpu_custom_call.1} parent=1 // pred_fallthru
      _
    // Predicated region
    $region34: #{tpu_custom_call.1} parent=1 // pred_check
      _
    $region35: #{tpu_custom_call.1} parent=1 // pred_check_branch
      %74 = sbr.rel (0) target = $region37
    $region36: #{tpu_custom_call.1} parent=1 // pred_region
      %75 = dma.done [#allocation6], 512
    $region37: #{tpu_custom_call.1} parent=1 // pred_fallthru
      _
    // Predicated region
    $region38: #{tpu_custom_call.1} parent=1 // pred_check
      _
    $region39: #{tpu_custom_call.1} parent=1 // pred_check_branch
      %77 = sbr.rel (0) target = $region41
    $region40: #{tpu_custom_call.1} parent=1 // pred_region
      %78 = dma.done [#allocation9], 256
    $region41: #{tpu_custom_call.1} parent=1 // pred_fallthru
      _
    %v79 = vld [vmem:[#allocation2] sm:$0xff]
    %v80 = vld [vmem:[#allocation2 + $0x8] sm:$0xff]
    %v81 = vld [vmem:[#allocation5] sm:$0xff]
    %v82 = vld [vmem:[#allocation5 + $0x8] sm:$0xff]
    %v83 = vld [vmem:[#allocation5 + $0x10] sm:$0xff]
    %v84 = vld [vmem:[#allocation5 + $0x18] sm:$0xff]
    %v85 = vld [vmem:[%s2] sm:$0x1]
    %v87 = vlaneseq
    %v88 = vshrl.u32 %v87, 7
    %v89 = vsub.s32 0, %v88
    %v90 = vrot.slane %v85, %v89
    %vm92 = vcmask 261120
    %v94 = vsel %vm92, %v79, 0
    %v97 = vsel %vm92, %v80, 0
    %99 = vmatprep.subr.mxu0 0.0
    %100 = vmatpush1.msra.mxu0 0.0
    %101 = vmatprep.subr.mxu0 0.0
    %102 = vmatpush1.msra.mxu0 0.0
    %103 = vmatprep.subr.mxu0 0.0
    %104 = vmatpush1.msra.mxu0 0.0
    %105 = vmatprep.subr.mxu0 0.0
    %106 = vmatpush1.msra.mxu0 0.0
    %107 = vmatprep.subr.mxu0 0.0
    %108 = vmatpush1.msra.mxu0 0.0
    %109 = vmatprep.subr.mxu0 0.0
    %110 = vmatpush1.msra.mxu0 0.0
    %111 = vmatprep.subr.mxu0 0.0
    %112 = vmatpush1.msra.mxu0 0.0
    %113 = vmatprep.subr.mxu0 0.0
    %114 = vmatpush1.msra.mxu0 0.0
    %115 = vmatprep.subr.mxu0 0.0
    %116 = vmatpush1.msra.mxu0 0.0
    %117 = vmatprep.subr.mxu0 0.0
    %118 = vmatpush1.msra.mxu0 0.0
    %119 = vmatprep.subr.mxu0 0.0
    %120 = vmatpush1.msra.mxu0 0.0
    %121 = vmatprep.subr.mxu0 0.0
    %122 = vmatpush1.msra.mxu0 0.0
    %123 = vmatprep.subr.mxu0 0.0
    %124 = vmatpush1.msra.mxu0 %v84
    %125 = vmatprep.subr.mxu0 0.0
    %126 = vmatpush1.msra.mxu0 %v83
    %127 = vmatprep.subr.mxu0 0.0
    %128 = vmatpush1.msra.mxu0 %v82
    %129 = vmatprep.subr.mxu0 0.0
    %130 = vmatpush1.msra.mxu0 %v81
    %131 = vmatprep.subr.mxu0 0.0
    %132 = vmatpush2.msra.mxu0 0.0
    %133 = vmatprep.subr.mxu0 0.0
    %134 = vmatpush2.msra.mxu0 0.0
    %135 = vmatprep.subr.mxu0 0.0
    %136 = vmatpush2.msra.mxu0 0.0
    %137 = vmatprep.subr.mxu0 0.0
    %138 = vmatpush2.msra.mxu0 0.0
    %139 = vmatprep.subr.mxu0 0.0
    %140 = vmatpush2.msra.mxu0 0.0
    %141 = vmatprep.subr.mxu0 0.0
    %142 = vmatpush2.msra.mxu0 0.0
    %143 = vmatprep.subr.mxu0 0.0
    %144 = vmatpush2.msra.mxu0 0.0
    %145 = vmatprep.subr.mxu0 0.0
    %146 = vmatpush2.msra.mxu0 0.0
    %147 = vmatprep.subr.mxu0 0.0
    %148 = vmatpush2.msra.mxu0 0.0
    %149 = vmatprep.subr.mxu0 0.0
    %150 = vmatpush2.msra.mxu0 0.0
    %151 = vmatprep.subr.mxu0 0.0
    %152 = vmatpush2.msra.mxu0 0.0
    %153 = vmatprep.subr.mxu0 0.0
    %154 = vmatpush2.msra.mxu0 0.0
    %155 = vmatprep.subr.mxu0 0.0
    %156 = vmatpush2.msra.mxu0 0.0
    %157 = vmatprep.subr.mxu0 0.0
    %158 = vmatpush2.msra.mxu0 0.0
    %159 = vmatprep.subr.mxu0 0.0
    %160 = vmatpush2.msra.mxu0 0.0
    %161 = vmatprep.subr.mxu0 0.0
    %162 = vmatpush2.msra.mxu0 0.0
    %163 = vmatprep.mubr.f32.mxu0 0.0
    %164 = vmatmul.mubr.f32.gmra.mxu0 %v94
    %v165 = vpop.f32.mrf.mxu0
    %v166 = vadd.f32 %v90, %v165
    %v167 = vpop.f32.mrf.mxu0
    %168 = vmatprep.mubr.f32.mxu0 0.0
    %169 = vmatmul.mubr.f32.gmra.mxu0 %v97
    %v170 = vpop.f32.mrf.mxu0
    %v171 = vadd.f32 %v90, %v170
    %v172 = vpop.f32.mrf.mxu0
    %173 = vdwg.mxu0
    %176 = vrot.lane.b32.xlu0 %v166, 120
    %v177 = vpop.permute.xlu0 %176
    %178 = vrot.lane.b32.xlu0 %v171, 120
    %v179 = vpop.permute.xlu0 %178
    %182 = vrot.lane.b32.xlu0 %v166, 112
    %v183 = vpop.permute.xlu0 %182
    %184 = vrot.lane.b32.xlu0 %v171, 112
    %v185 = vpop.permute.xlu0 %184
    %188 = vrot.lane.b32.xlu0 %v166, 104
    %v189 = vpop.permute.xlu0 %188
    %190 = vrot.lane.b32.xlu0 %v171, 104
    %v191 = vpop.permute.xlu0 %190
    %194 = vrot.lane.b32.xlu0 %v166, 96
    %v195 = vpop.permute.xlu0 %194
    %196 = vrot.lane.b32.xlu0 %v171, 96
    %v197 = vpop.permute.xlu0 %196
    %200 = vrot.lane.b32.xlu0 %v166, 88
    %v201 = vpop.permute.xlu0 %200
    %202 = vrot.lane.b32.xlu0 %v171, 88
    %v203 = vpop.permute.xlu0 %202
    %206 = vrot.lane.b32.xlu0 %v166, 80
    %v207 = vpop.permute.xlu0 %206
    %208 = vrot.lane.b32.xlu0 %v171, 80
    %v209 = vpop.permute.xlu0 %208
    %212 = vrot.lane.b32.xlu0 %v166, 72
    %v213 = vpop.permute.xlu0 %212
    %214 = vrot.lane.b32.xlu0 %v171, 72
    %v215 = vpop.permute.xlu0 %214
    %218 = vrot.lane.b32.xlu0 %v166, 64
    %v219 = vpop.permute.xlu0 %218
    %220 = vrot.lane.b32.xlu0 %v171, 64
    %v221 = vpop.permute.xlu0 %220
    %224 = vrot.lane.b32.xlu0 %v166, 56
    %v225 = vpop.permute.xlu0 %224
    %226 = vrot.lane.b32.xlu0 %v171, 56
    %v227 = vpop.permute.xlu0 %226
    %230 = vrot.lane.b32.xlu0 %v166, 48
    %v231 = vpop.permute.xlu0 %230
    %232 = vrot.lane.b32.xlu0 %v171, 48
    %v233 = vpop.permute.xlu0 %232
    %236 = vrot.lane.b32.xlu0 %v166, 40
    %v237 = vpop.permute.xlu0 %236
    %238 = vrot.lane.b32.xlu0 %v171, 40
    %v239 = vpop.permute.xlu0 %238
    %v242 = vcombine.low %v166, %v183
    %v243 = vcombine.high %v166, %v183
    %v245 = vunpack.c.l.s4 1983009808
    %v246 = vunpack.c.0.s8 %v245
    %v247 = vlaneseq
    %v248 = vshrl.u32 %v247, 7
    %v249 = vsub.s32 %v246, %v248
    %v250 = vrot.slane %v242, %v249
    %v252 = vunpack.c.l.s4 1983009808
    %v253 = vunpack.c.0.s8 %v252
    %v254 = vlaneseq
    %v255 = vshrl.u32 %v254, 7
    %v256 = vsub.s32 %v253, %v255
    %v257 = vrot.slane %v243, %v256
    %v258 = vcombine.low %v177, %v189
    %v259 = vcombine.high %v177, %v189
    %v261 = vunpack.c.l.s4 1983009808
    %v262 = vunpack.c.0.s8 %v261
    %v263 = vlaneseq
    %v264 = vshrl.u32 %v263, 7
    %v265 = vsub.s32 %v262, %v264
    %v266 = vrot.slane %v258, %v265
    %v268 = vunpack.c.l.s4 1983009808
    %v269 = vunpack.c.0.s8 %v268
    %v270 = vlaneseq
    %v271 = vshrl.u32 %v270, 7
    %v272 = vsub.s32 %v269, %v271
    %v273 = vrot.slane %v259, %v272
    %v274 = vcombine.low %v195, %v207
    %v275 = vcombine.high %v195, %v207
    %v277 = vunpack.c.l.s4 1983009808
    %v278 = vunpack.c.0.s8 %v277
    %v279 = vlaneseq
    %v280 = vshrl.u32 %v279, 7
    %v281 = vsub.s32 %v278, %v280
    %v282 = vrot.slane %v274, %v281
    %v284 = vunpack.c.l.s4 1983009808
    %v285 = vunpack.c.0.s8 %v284
    %v286 = vlaneseq
    %v287 = vshrl.u32 %v286, 7
    %v288 = vsub.s32 %v285, %v287
    %v289 = vrot.slane %v275, %v288
    %v290 = vcombine.low %v201, %v213
    %v291 = vcombine.high %v201, %v213
    %v293 = vunpack.c.l.s4 1983009808
    %v294 = vunpack.c.0.s8 %v293
    %v295 = vlaneseq
    %v296 = vshrl.u32 %v295, 7
    %v297 = vsub.s32 %v294, %v296
    %v298 = vrot.slane %v290, %v297
    %v300 = vunpack.c.l.s4 1983009808
    %v301 = vunpack.c.0.s8 %v300
    %v302 = vlaneseq
    %v303 = vshrl.u32 %v302, 7
    %v304 = vsub.s32 %v301, %v303
    %v305 = vrot.slane %v291, %v304
    %v306 = vcombine.low %v250, %v266
    %v307 = vcombine.high %v250, %v266
    %v309 = vunpack.c.l.s4 1934713408
    %v310 = vunpack.c.0.s8 %v309
    %v311 = vlaneseq
    %v312 = vshrl.u32 %v311, 7
    %v313 = vsub.s32 %v310, %v312
    %v314 = vrot.slane %v306, %v313
    %v316 = vunpack.c.l.s4 1934713408
    %v317 = vunpack.c.0.s8 %v316
    %v318 = vlaneseq
    %v319 = vshrl.u32 %v318, 7
    %v320 = vsub.s32 %v317, %v319
    %v321 = vrot.slane %v307, %v320
    %v322 = vcombine.low %v257, %v273
    %v323 = vcombine.high %v257, %v273
    %v325 = vunpack.c.l.s4 1934713408
    %v326 = vunpack.c.0.s8 %v325
    %v327 = vlaneseq
    %v328 = vshrl.u32 %v327, 7
    %v329 = vsub.s32 %v326, %v328
    %v330 = vrot.slane %v322, %v329
    %v332 = vunpack.c.l.s4 1934713408
    %v333 = vunpack.c.0.s8 %v332
    %v334 = vlaneseq
    %v335 = vshrl.u32 %v334, 7
    %v336 = vsub.s32 %v333, %v335
    %v337 = vrot.slane %v323, %v336
    %v338 = vcombine.low %v282, %v298
    %v339 = vcombine.high %v282, %v298
    %v341 = vunpack.c.l.s4 1934713408
    %v342 = vunpack.c.0.s8 %v341
    %v343 = vlaneseq
    %v344 = vshrl.u32 %v343, 7
    %v345 = vsub.s32 %v342, %v344
    %v346 = vrot.slane %v338, %v345
    %v348 = vunpack.c.l.s4 1934713408
    %v349 = vunpack.c.0.s8 %v348
    %v350 = vlaneseq
    %v351 = vshrl.u32 %v350, 7
    %v352 = vsub.s32 %v349, %v351
    %v353 = vrot.slane %v339, %v352
    %v354 = vcombine.low %v289, %v305
    %v355 = vcombine.high %v289, %v305
    %v357 = vunpack.c.l.s4 1934713408
    %v358 = vunpack.c.0.s8 %v357
    %v359 = vlaneseq
    %v360 = vshrl.u32 %v359, 7
    %v361 = vsub.s32 %v358, %v360
    %v362 = vrot.slane %v354, %v361
    %v364 = vunpack.c.l.s4 1934713408
    %v365 = vunpack.c.0.s8 %v364
    %v366 = vlaneseq
    %v367 = vshrl.u32 %v366, 7
    %v368 = vsub.s32 %v365, %v367
    %v369 = vrot.slane %v355, %v368
    %v370 = vcombine.low %v314, %v346
    %v371 = vcombine.high %v314, %v346
    %v372 = vcombine.low %v321, %v353
    %v373 = vcombine.high %v321, %v353
    %v374 = vcombine.low %v330, %v362
    %v375 = vcombine.high %v330, %v362
    %v376 = vcombine.low %v337, %v369
    %v377 = vcombine.high %v337, %v369
    %v378 = vcombine.low %v219, %v231
    %v379 = vcombine.high %v219, %v231
    %v381 = vunpack.c.l.s4 1983009808
    %v382 = vunpack.c.0.s8 %v381
    %v383 = vlaneseq
    %v384 = vshrl.u32 %v383, 7
    %v385 = vsub.s32 %v382, %v384
    %v386 = vrot.slane %v378, %v385
    %v388 = vunpack.c.l.s4 1983009808
    %v389 = vunpack.c.0.s8 %v388
    %v390 = vlaneseq
    %v391 = vshrl.u32 %v390, 7
    %v392 = vsub.s32 %v389, %v391
    %v393 = vrot.slane %v379, %v392
    %v394 = vcombine.low %v225, %v237
    %v395 = vcombine.high %v225, %v237
    %v397 = vunpack.c.l.s4 1983009808
    %v398 = vunpack.c.0.s8 %v397
    %v399 = vlaneseq
    %v400 = vshrl.u32 %v399, 7
    %v401 = vsub.s32 %v398, %v400
    %v402 = vrot.slane %v394, %v401
    %v404 = vunpack.c.l.s4 1983009808
    %v405 = vunpack.c.0.s8 %v404
    %v406 = vlaneseq
    %v407 = vshrl.u32 %v406, 7
    %v408 = vsub.s32 %v405, %v407
    %v409 = vrot.slane %v395, %v408
    %v410 = vcombine.low %v386, %v402
    %v411 = vcombine.high %v386, %v402
    %v413 = vunpack.c.l.s4 1934713408
    %v414 = vunpack.c.0.s8 %v413
    %v415 = vlaneseq
    %v416 = vshrl.u32 %v415, 7
    %v417 = vsub.s32 %v414, %v416
    %v418 = vrot.slane %v410, %v417
    %v420 = vunpack.c.l.s4 1934713408
    %v421 = vunpack.c.0.s8 %v420
    %v422 = vlaneseq
    %v423 = vshrl.u32 %v422, 7
    %v424 = vsub.s32 %v421, %v423
    %v425 = vrot.slane %v411, %v424
    %v426 = vcombine.low %v393, %v409
    %v427 = vcombine.high %v393, %v409
    %v429 = vunpack.c.l.s4 1934713408
    %v430 = vunpack.c.0.s8 %v429
    %v431 = vlaneseq
    %v432 = vshrl.u32 %v431, 7
    %v433 = vsub.s32 %v430, %v432
    %v434 = vrot.slane %v426, %v433
    %v436 = vunpack.c.l.s4 1934713408
    %v437 = vunpack.c.0.s8 %v436
    %v438 = vlaneseq
    %v439 = vshrl.u32 %v438, 7
    %v440 = vsub.s32 %v437, %v439
    %v441 = vrot.slane %v427, %v440
    %v442 = vcombine.high %v418, 0.0
    %v443 = vcombine.high %v425, 0.0
    %v444 = vcombine.high %v434, 0.0
    %v445 = vcombine.high %v441, 0.0
    %v446 = vcombine.low %v171, %v185
    %v447 = vcombine.high %v171, %v185
    %v449 = vunpack.c.l.s4 1983009808
    %v450 = vunpack.c.0.s8 %v449
    %v451 = vlaneseq
    %v452 = vshrl.u32 %v451, 7
    %v453 = vsub.s32 %v450, %v452
    %v454 = vrot.slane %v446, %v453
    %v456 = vunpack.c.l.s4 1983009808
    %v457 = vunpack.c.0.s8 %v456
    %v458 = vlaneseq
    %v459 = vshrl.u32 %v458, 7
    %v460 = vsub.s32 %v457, %v459
    %v461 = vrot.slane %v447, %v460
    %v462 = vcombine.low %v179, %v191
    %v463 = vcombine.high %v179, %v191
    %v465 = vunpack.c.l.s4 1983009808
    %v466 = vunpack.c.0.s8 %v465
    %v467 = vlaneseq
    %v468 = vshrl.u32 %v467, 7
    %v469 = vsub.s32 %v466, %v468
    %v470 = vrot.slane %v462, %v469
    %v472 = vunpack.c.l.s4 1983009808
    %v473 = vunpack.c.0.s8 %v472
    %v474 = vlaneseq
    %v475 = vshrl.u32 %v474, 7
    %v476 = vsub.s32 %v473, %v475
    %v477 = vrot.slane %v463, %v476
    %v478 = vcombine.low %v197, %v209
    %v479 = vcombine.high %v197, %v209
    %v481 = vunpack.c.l.s4 1983009808
    %v482 = vunpack.c.0.s8 %v481
    %v483 = vlaneseq
    %v484 = vshrl.u32 %v483, 7
    %v485 = vsub.s32 %v482, %v484
    %v486 = vrot.slane %v478, %v485
    %v488 = vunpack.c.l.s4 1983009808
    %v489 = vunpack.c.0.s8 %v488
    %v490 = vlaneseq
    %v491 = vshrl.u32 %v490, 7
    %v492 = vsub.s32 %v489, %v491
    %v493 = vrot.slane %v479, %v492
    %v494 = vcombine.low %v203, %v215
    %v495 = vcombine.high %v203, %v215
    %v497 = vunpack.c.l.s4 1983009808
    %v498 = vunpack.c.0.s8 %v497
    %v499 = vlaneseq
    %v500 = vshrl.u32 %v499, 7
    %v501 = vsub.s32 %v498, %v500
    %v502 = vrot.slane %v494, %v501
    %v504 = vunpack.c.l.s4 1983009808
    %v505 = vunpack.c.0.s8 %v504
    %v506 = vlaneseq
    %v507 = vshrl.u32 %v506, 7
    %v508 = vsub.s32 %v505, %v507
    %v509 = vrot.slane %v495, %v508
    %v510 = vcombine.low %v454, %v470
    %v511 = vcombine.high %v454, %v470
    %v513 = vunpack.c.l.s4 1934713408
    %v514 = vunpack.c.0.s8 %v513
    %v515 = vlaneseq
    %v516 = vshrl.u32 %v515, 7
    %v517 = vsub.s32 %v514, %v516
    %v518 = vrot.slane %v510, %v517
    %v520 = vunpack.c.l.s4 1934713408
    %v521 = vunpack.c.0.s8 %v520
    %v522 = vlaneseq
    %v523 = vshrl.u32 %v522, 7
    %v524 = vsub.s32 %v521, %v523
    %v525 = vrot.slane %v511, %v524
    %v526 = vcombine.low %v461, %v477
    %v527 = vcombine.high %v461, %v477
    %v529 = vunpack.c.l.s4 1934713408
    %v530 = vunpack.c.0.s8 %v529
    %v531 = vlaneseq
    %v532 = vshrl.u32 %v531, 7
    %v533 = vsub.s32 %v530, %v532
    %v534 = vrot.slane %v526, %v533
    %v536 = vunpack.c.l.s4 1934713408
    %v537 = vunpack.c.0.s8 %v536
    %v538 = vlaneseq
    %v539 = vshrl.u32 %v538, 7
    %v540 = vsub.s32 %v537, %v539
    %v541 = vrot.slane %v527, %v540
    %v542 = vcombine.low %v486, %v502
    %v543 = vcombine.high %v486, %v502
    %v545 = vunpack.c.l.s4 1934713408
    %v546 = vunpack.c.0.s8 %v545
    %v547 = vlaneseq
    %v548 = vshrl.u32 %v547, 7
    %v549 = vsub.s32 %v546, %v548
    %v550 = vrot.slane %v542, %v549
    %v552 = vunpack.c.l.s4 1934713408
    %v553 = vunpack.c.0.s8 %v552
    %v554 = vlaneseq
    %v555 = vshrl.u32 %v554, 7
    %v556 = vsub.s32 %v553, %v555
    %v557 = vrot.slane %v543, %v556
    %v558 = vcombine.low %v493, %v509
    %v559 = vcombine.high %v493, %v509
    %v561 = vunpack.c.l.s4 1934713408
    %v562 = vunpack.c.0.s8 %v561
    %v563 = vlaneseq
    %v564 = vshrl.u32 %v563, 7
    %v565 = vsub.s32 %v562, %v564
    %v566 = vrot.slane %v558, %v565
    %v568 = vunpack.c.l.s4 1934713408
    %v569 = vunpack.c.0.s8 %v568
    %v570 = vlaneseq
    %v571 = vshrl.u32 %v570, 7
    %v572 = vsub.s32 %v569, %v571
    %v573 = vrot.slane %v559, %v572
    %v574 = vcombine.low %v518, %v550
    %v575 = vcombine.high %v518, %v550
    %v576 = vcombine.low %v525, %v557
    %v577 = vcombine.high %v525, %v557
    %v578 = vcombine.low %v534, %v566
    %v579 = vcombine.high %v534, %v566
    %v580 = vcombine.low %v541, %v573
    %v581 = vcombine.high %v541, %v573
    %v582 = vcombine.low %v221, %v233
    %v583 = vcombine.high %v221, %v233
    %v585 = vunpack.c.l.s4 1983009808
    %v586 = vunpack.c.0.s8 %v585
    %v587 = vlaneseq
    %v588 = vshrl.u32 %v587, 7
    %v589 = vsub.s32 %v586, %v588
    %v590 = vrot.slane %v582, %v589
    %v592 = vunpack.c.l.s4 1983009808
    %v593 = vunpack.c.0.s8 %v592
    %v594 = vlaneseq
    %v595 = vshrl.u32 %v594, 7
    %v596 = vsub.s32 %v593, %v595
    %v597 = vrot.slane %v583, %v596
    %v598 = vcombine.low %v227, %v239
    %v599 = vcombine.high %v227, %v239
    %v601 = vunpack.c.l.s4 1983009808
    %v602 = vunpack.c.0.s8 %v601
    %v603 = vlaneseq
    %v604 = vshrl.u32 %v603, 7
    %v605 = vsub.s32 %v602, %v604
    %v606 = vrot.slane %v598, %v605
    %v608 = vunpack.c.l.s4 1983009808
    %v609 = vunpack.c.0.s8 %v608
    %v610 = vlaneseq
    %v611 = vshrl.u32 %v610, 7
    %v612 = vsub.s32 %v609, %v611
    %v613 = vrot.slane %v599, %v612
    %v614 = vcombine.low %v590, %v606
    %v615 = vcombine.high %v590, %v606
    %v617 = vunpack.c.l.s4 1934713408
    %v618 = vunpack.c.0.s8 %v617
    %v619 = vlaneseq
    %v620 = vshrl.u32 %v619, 7
    %v621 = vsub.s32 %v618, %v620
    %v622 = vrot.slane %v614, %v621
    %v624 = vunpack.c.l.s4 1934713408
    %v625 = vunpack.c.0.s8 %v624
    %v626 = vlaneseq
    %v627 = vshrl.u32 %v626, 7
    %v628 = vsub.s32 %v625, %v627
    %v629 = vrot.slane %v615, %v628
    %v630 = vcombine.low %v597, %v613
    %v631 = vcombine.high %v597, %v613
    %v633 = vunpack.c.l.s4 1934713408
    %v634 = vunpack.c.0.s8 %v633
    %v635 = vlaneseq
    %v636 = vshrl.u32 %v635, 7
    %v637 = vsub.s32 %v634, %v636
    %v638 = vrot.slane %v630, %v637
    %v640 = vunpack.c.l.s4 1934713408
    %v641 = vunpack.c.0.s8 %v640
    %v642 = vlaneseq
    %v643 = vshrl.u32 %v642, 7
    %v644 = vsub.s32 %v641, %v643
    %v645 = vrot.slane %v631, %v644
    %v646 = vcombine.high %v622, 0.0
    %v647 = vcombine.high %v629, 0.0
    %v648 = vcombine.high %v638, 0.0
    %v649 = vcombine.high %v645, 0.0
    %v650 = vcombine.low %v370, %v372
    %v651 = vcombine.high %v370, %v372
    %v653 = vunpack.c.l.s4 1983009808
    %v654 = vunpack.c.0.s8 %v653
    %v655 = vlaneseq
    %v656 = vshrl.u32 %v655, 7
    %v657 = vsub.s32 %v654, %v656
    %v658 = vrot.slane %v650, %v657
    %v660 = vunpack.c.l.s4 1983009808
    %v661 = vunpack.c.0.s8 %v660
    %v662 = vlaneseq
    %v663 = vshrl.u32 %v662, 7
    %v664 = vsub.s32 %v661, %v663
    %v665 = vrot.slane %v651, %v664
    %v666 = vcombine.low %v371, %v373
    %v667 = vcombine.high %v371, %v373
    %v669 = vunpack.c.l.s4 1983009808
    %v670 = vunpack.c.0.s8 %v669
    %v671 = vlaneseq
    %v672 = vshrl.u32 %v671, 7
    %v673 = vsub.s32 %v670, %v672
    %v674 = vrot.slane %v666, %v673
    %v676 = vunpack.c.l.s4 1983009808
    %v677 = vunpack.c.0.s8 %v676
    %v678 = vlaneseq
    %v679 = vshrl.u32 %v678, 7
    %v680 = vsub.s32 %v677, %v679
    %v681 = vrot.slane %v667, %v680
    %v682 = vcombine.low %v374, %v376
    %v683 = vcombine.high %v374, %v376
    %v685 = vunpack.c.l.s4 1983009808
    %v686 = vunpack.c.0.s8 %v685
    %v687 = vlaneseq
    %v688 = vshrl.u32 %v687, 7
    %v689 = vsub.s32 %v686, %v688
    %v690 = vrot.slane %v682, %v689
    %v692 = vunpack.c.l.s4 1983009808
    %v693 = vunpack.c.0.s8 %v692
    %v694 = vlaneseq
    %v695 = vshrl.u32 %v694, 7
    %v696 = vsub.s32 %v693, %v695
    %v697 = vrot.slane %v683, %v696
    %v698 = vcombine.low %v375, %v377
    %v699 = vcombine.high %v375, %v377
    %v701 = vunpack.c.l.s4 1983009808
    %v702 = vunpack.c.0.s8 %v701
    %v703 = vlaneseq
    %v704 = vshrl.u32 %v703, 7
    %v705 = vsub.s32 %v702, %v704
    %v706 = vrot.slane %v698, %v705
    %v708 = vunpack.c.l.s4 1983009808
    %v709 = vunpack.c.0.s8 %v708
    %v710 = vlaneseq
    %v711 = vshrl.u32 %v710, 7
    %v712 = vsub.s32 %v709, %v711
    %v713 = vrot.slane %v699, %v712
    %v714 = vcombine.low %v658, %v674
    %v715 = vcombine.high %v658, %v674
    %v717 = vunpack.c.l.s4 1934713408
    %v718 = vunpack.c.0.s8 %v717
    %v719 = vlaneseq
    %v720 = vshrl.u32 %v719, 7
    %v721 = vsub.s32 %v718, %v720
    %v722 = vrot.slane %v714, %v721
    %v724 = vunpack.c.l.s4 1934713408
    %v725 = vunpack.c.0.s8 %v724
    %v726 = vlaneseq
    %v727 = vshrl.u32 %v726, 7
    %v728 = vsub.s32 %v725, %v727
    %v729 = vrot.slane %v715, %v728
    %v730 = vcombine.low %v665, %v681
    %v731 = vcombine.high %v665, %v681
    %v733 = vunpack.c.l.s4 1934713408
    %v734 = vunpack.c.0.s8 %v733
    %v735 = vlaneseq
    %v736 = vshrl.u32 %v735, 7
    %v737 = vsub.s32 %v734, %v736
    %v738 = vrot.slane %v730, %v737
    %v740 = vunpack.c.l.s4 1934713408
    %v741 = vunpack.c.0.s8 %v740
    %v742 = vlaneseq
    %v743 = vshrl.u32 %v742, 7
    %v744 = vsub.s32 %v741, %v743
    %v745 = vrot.slane %v731, %v744
    %v746 = vcombine.low %v690, %v706
    %v747 = vcombine.high %v690, %v706
    %v749 = vunpack.c.l.s4 1934713408
    %v750 = vunpack.c.0.s8 %v749
    %v751 = vlaneseq
    %v752 = vshrl.u32 %v751, 7
    %v753 = vsub.s32 %v750, %v752
    %v754 = vrot.slane %v746, %v753
    %v756 = vunpack.c.l.s4 1934713408
    %v757 = vunpack.c.0.s8 %v756
    %v758 = vlaneseq
    %v759 = vshrl.u32 %v758, 7
    %v760 = vsub.s32 %v757, %v759
    %v761 = vrot.slane %v747, %v760
    %v762 = vcombine.low %v697, %v713
    %v763 = vcombine.high %v697, %v713
    %v765 = vunpack.c.l.s4 1934713408
    %v766 = vunpack.c.0.s8 %v765
    %v767 = vlaneseq
    %v768 = vshrl.u32 %v767, 7
    %v769 = vsub.s32 %v766, %v768
    %v770 = vrot.slane %v762, %v769
    %v772 = vunpack.c.l.s4 1934713408
    %v773 = vunpack.c.0.s8 %v772
    %v774 = vlaneseq
    %v775 = vshrl.u32 %v774, 7
    %v776 = vsub.s32 %v773, %v775
    %v777 = vrot.slane %v763, %v776
    %v778 = vcombine.low %v722, %v754
    %v779 = vcombine.high %v722, %v754
    %v780 = vcombine.low %v729, %v761
    %v781 = vcombine.high %v729, %v761
    %v782 = vcombine.low %v738, %v770
    %v783 = vcombine.high %v738, %v770
    %v784 = vcombine.low %v745, %v777
    %v785 = vcombine.high %v745, %v777
    %v786 = vcombine.low %v574, %v576
    %v787 = vcombine.high %v574, %v576
    %v789 = vunpack.c.l.s4 1983009808
    %v790 = vunpack.c.0.s8 %v789
    %v791 = vlaneseq
    %v792 = vshrl.u32 %v791, 7
    %v793 = vsub.s32 %v790, %v792
    %v794 = vrot.slane %v786, %v793
    %v796 = vunpack.c.l.s4 1983009808
    %v797 = vunpack.c.0.s8 %v796
    %v798 = vlaneseq
    %v799 = vshrl.u32 %v798, 7
    %v800 = vsub.s32 %v797, %v799
    %v801 = vrot.slane %v787, %v800
    %v802 = vcombine.low %v575, %v577
    %v803 = vcombine.high %v575, %v577
    %v805 = vunpack.c.l.s4 1983009808
    %v806 = vunpack.c.0.s8 %v805
    %v807 = vlaneseq
    %v808 = vshrl.u32 %v807, 7
    %v809 = vsub.s32 %v806, %v808
    %v810 = vrot.slane %v802, %v809
    %v812 = vunpack.c.l.s4 1983009808
    %v813 = vunpack.c.0.s8 %v812
    %v814 = vlaneseq
    %v815 = vshrl.u32 %v814, 7
    %v816 = vsub.s32 %v813, %v815
    %v817 = vrot.slane %v803, %v816
    %v818 = vcombine.low %v578, %v580
    %v819 = vcombine.high %v578, %v580
    %v821 = vunpack.c.l.s4 1983009808
    %v822 = vunpack.c.0.s8 %v821
    %v823 = vlaneseq
    %v824 = vshrl.u32 %v823, 7
    %v825 = vsub.s32 %v822, %v824
    %v826 = vrot.slane %v818, %v825
    %v828 = vunpack.c.l.s4 1983009808
    %v829 = vunpack.c.0.s8 %v828
    %v830 = vlaneseq
    %v831 = vshrl.u32 %v830, 7
    %v832 = vsub.s32 %v829, %v831
    %v833 = vrot.slane %v819, %v832
    %v834 = vcombine.low %v579, %v581
    %v835 = vcombine.high %v579, %v581
    %v837 = vunpack.c.l.s4 1983009808
    %v838 = vunpack.c.0.s8 %v837
    %v839 = vlaneseq
    %v840 = vshrl.u32 %v839, 7
    %v841 = vsub.s32 %v838, %v840
    %v842 = vrot.slane %v834, %v841
    %v844 = vunpack.c.l.s4 1983009808
    %v845 = vunpack.c.0.s8 %v844
    %v846 = vlaneseq
    %v847 = vshrl.u32 %v846, 7
    %v848 = vsub.s32 %v845, %v847
    %v849 = vrot.slane %v835, %v848
    %v850 = vcombine.low %v794, %v810
    %v851 = vcombine.high %v794, %v810
    %v853 = vunpack.c.l.s4 1934713408
    %v854 = vunpack.c.0.s8 %v853
    %v855 = vlaneseq
    %v856 = vshrl.u32 %v855, 7
    %v857 = vsub.s32 %v854, %v856
    %v858 = vrot.slane %v850, %v857
    %v860 = vunpack.c.l.s4 1934713408
    %v861 = vunpack.c.0.s8 %v860
    %v862 = vlaneseq
    %v863 = vshrl.u32 %v862, 7
    %v864 = vsub.s32 %v861, %v863
    %v865 = vrot.slane %v851, %v864
    %v866 = vcombine.low %v801, %v817
    %v867 = vcombine.high %v801, %v817
    %v869 = vunpack.c.l.s4 1934713408
    %v870 = vunpack.c.0.s8 %v869
    %v871 = vlaneseq
    %v872 = vshrl.u32 %v871, 7
    %v873 = vsub.s32 %v870, %v872
    %v874 = vrot.slane %v866, %v873
    %v876 = vunpack.c.l.s4 1934713408
    %v877 = vunpack.c.0.s8 %v876
    %v878 = vlaneseq
    %v879 = vshrl.u32 %v878, 7
    %v880 = vsub.s32 %v877, %v879
    %v881 = vrot.slane %v867, %v880
    %v882 = vcombine.low %v826, %v842
    %v883 = vcombine.high %v826, %v842
    %v885 = vunpack.c.l.s4 1934713408
    %v886 = vunpack.c.0.s8 %v885
    %v887 = vlaneseq
    %v888 = vshrl.u32 %v887, 7
    %v889 = vsub.s32 %v886, %v888
    %v890 = vrot.slane %v882, %v889
    %v892 = vunpack.c.l.s4 1934713408
    %v893 = vunpack.c.0.s8 %v892
    %v894 = vlaneseq
    %v895 = vshrl.u32 %v894, 7
    %v896 = vsub.s32 %v893, %v895
    %v897 = vrot.slane %v883, %v896
    %v898 = vcombine.low %v833, %v849
    %v899 = vcombine.high %v833, %v849
    %v901 = vunpack.c.l.s4 1934713408
    %v902 = vunpack.c.0.s8 %v901
    %v903 = vlaneseq
    %v904 = vshrl.u32 %v903, 7
    %v905 = vsub.s32 %v902, %v904
    %v906 = vrot.slane %v898, %v905
    %v908 = vunpack.c.l.s4 1934713408
    %v909 = vunpack.c.0.s8 %v908
    %v910 = vlaneseq
    %v911 = vshrl.u32 %v910, 7
    %v912 = vsub.s32 %v909, %v911
    %v913 = vrot.slane %v899, %v912
    %v914 = vcombine.low %v858, %v890
    %v915 = vcombine.high %v858, %v890
    %v916 = vcombine.low %v865, %v897
    %v917 = vcombine.high %v865, %v897
    %v918 = vcombine.low %v874, %v906
    %v919 = vcombine.high %v874, %v906
    %v920 = vcombine.low %v881, %v913
    %v921 = vcombine.high %v881, %v913
    %v922 = vcombine.low %v418, %v425
    %v924 = vunpack.c.l.s4 1983009808
    %v925 = vunpack.c.0.s8 %v924
    %v926 = vlaneseq
    %v927 = vshrl.u32 %v926, 7
    %v928 = vsub.s32 %v925, %v927
    %v929 = vrot.slane %v922, %v928
    %v930 = vcombine.low %v442, %v443
    %v932 = vunpack.c.l.s4 1983009808
    %v933 = vunpack.c.0.s8 %v932
    %v934 = vlaneseq
    %v935 = vshrl.u32 %v934, 7
    %v936 = vsub.s32 %v933, %v935
    %v937 = vrot.slane %v930, %v936
    %v938 = vcombine.low %v434, %v441
    %v940 = vunpack.c.l.s4 1983009808
    %v941 = vunpack.c.0.s8 %v940
    %v942 = vlaneseq
    %v943 = vshrl.u32 %v942, 7
    %v944 = vsub.s32 %v941, %v943
    %v945 = vrot.slane %v938, %v944
    %v946 = vcombine.low %v444, %v445
    %v948 = vunpack.c.l.s4 1983009808
    %v949 = vunpack.c.0.s8 %v948
    %v950 = vlaneseq
    %v951 = vshrl.u32 %v950, 7
    %v952 = vsub.s32 %v949, %v951
    %v953 = vrot.slane %v946, %v952
    %v954 = vcombine.low %v929, %v937
    %v955 = vcombine.high %v929, %v937
    %v957 = vunpack.c.l.s4 1934713408
    %v958 = vunpack.c.0.s8 %v957
    %v959 = vlaneseq
    %v960 = vshrl.u32 %v959, 7
    %v961 = vsub.s32 %v958, %v960
    %v962 = vrot.slane %v954, %v961
    %v964 = vunpack.c.l.s4 1934713408
    %v965 = vunpack.c.0.s8 %v964
    %v966 = vlaneseq
    %v967 = vshrl.u32 %v966, 7
    %v968 = vsub.s32 %v965, %v967
    %v969 = vrot.slane %v955, %v968
    %v970 = vcombine.low %v945, %v953
    %v971 = vcombine.high %v945, %v953
    %v973 = vunpack.c.l.s4 1934713408
    %v974 = vunpack.c.0.s8 %v973
    %v975 = vlaneseq
    %v976 = vshrl.u32 %v975, 7
    %v977 = vsub.s32 %v974, %v976
    %v978 = vrot.slane %v970, %v977
    %v980 = vunpack.c.l.s4 1934713408
    %v981 = vunpack.c.0.s8 %v980
    %v982 = vlaneseq
    %v983 = vshrl.u32 %v982, 7
    %v984 = vsub.s32 %v981, %v983
    %v985 = vrot.slane %v971, %v984
    %v986 = vcombine.low %v962, %v978
    %v987 = vcombine.high %v962, %v978
    %v988 = vcombine.low %v969, %v985
    %v989 = vcombine.high %v969, %v985
    %v990 = vcombine.low %v622, %v629
    %v992 = vunpack.c.l.s4 1983009808
    %v993 = vunpack.c.0.s8 %v992
    %v994 = vlaneseq
    %v995 = vshrl.u32 %v994, 7
    %v996 = vsub.s32 %v993, %v995
    %v997 = vrot.slane %v990, %v996
    %v998 = vcombine.low %v646, %v647
    %v1000 = vunpack.c.l.s4 1983009808
    %v1001 = vunpack.c.0.s8 %v1000
    %v1002 = vlaneseq
    %v1003 = vshrl.u32 %v1002, 7
    %v1004 = vsub.s32 %v1001, %v1003
    %v1005 = vrot.slane %v998, %v1004
    %v1006 = vcombine.low %v638, %v645
    %v1008 = vunpack.c.l.s4 1983009808
    %v1009 = vunpack.c.0.s8 %v1008
    %v1010 = vlaneseq
    %v1011 = vshrl.u32 %v1010, 7
    %v1012 = vsub.s32 %v1009, %v1011
    %v1013 = vrot.slane %v1006, %v1012
    %v1014 = vcombine.low %v648, %v649
    %v1016 = vunpack.c.l.s4 1983009808
    %v1017 = vunpack.c.0.s8 %v1016
    %v1018 = vlaneseq
    %v1019 = vshrl.u32 %v1018, 7
    %v1020 = vsub.s32 %v1017, %v1019
    %v1021 = vrot.slane %v1014, %v1020
    %v1022 = vcombine.low %v997, %v1005
    %v1023 = vcombine.high %v997, %v1005
    %v1025 = vunpack.c.l.s4 1934713408
    %v1026 = vunpack.c.0.s8 %v1025
    %v1027 = vlaneseq
    %v1028 = vshrl.u32 %v1027, 7
    %v1029 = vsub.s32 %v1026, %v1028
    %v1030 = vrot.slane %v1022, %v1029
    %v1032 = vunpack.c.l.s4 1934713408
    %v1033 = vunpack.c.0.s8 %v1032
    %v1034 = vlaneseq
    %v1035 = vshrl.u32 %v1034, 7
    %v1036 = vsub.s32 %v1033, %v1035
    %v1037 = vrot.slane %v1023, %v1036
    %v1038 = vcombine.low %v1013, %v1021
    %v1039 = vcombine.high %v1013, %v1021
    %v1041 = vunpack.c.l.s4 1934713408
    %v1042 = vunpack.c.0.s8 %v1041
    %v1043 = vlaneseq
    %v1044 = vshrl.u32 %v1043, 7
    %v1045 = vsub.s32 %v1042, %v1044
    %v1046 = vrot.slane %v1038, %v1045
    %v1048 = vunpack.c.l.s4 1934713408
    %v1049 = vunpack.c.0.s8 %v1048
    %v1050 = vlaneseq
    %v1051 = vshrl.u32 %v1050, 7
    %v1052 = vsub.s32 %v1049, %v1051
    %v1053 = vrot.slane %v1039, %v1052
    %v1054 = vcombine.low %v1030, %v1046
    %v1055 = vcombine.high %v1030, %v1046
    %v1056 = vcombine.low %v1037, %v1053
    %v1057 = vcombine.high %v1037, %v1053
    %v1058 = vld [vmem:[#allocation8] sm:$0xff]
    %v1059 = vld [vmem:[#allocation8 + $0x8] sm:$0xff]
    %vm1060 = vcmask 64512
    %v1062 = vsel %vm1060, %v778, 0
    %v1065 = vsel %vm1060, %v914, 0
    %v1068 = vsel %vm1060, %v782, 0
    %v1071 = vsel %vm1060, %v918, 0
    %1073 = vmatprep.subr.mxu0 0.0
    %1074 = vmatpush1.xpose.msra.mxu0 0.0
    %1075 = vmatprep.subr.mxu0 0.0
    %1076 = vmatpush1.xpose.msra.mxu0 0.0
    %1077 = vmatprep.subr.mxu0 0.0
    %1078 = vmatpush1.xpose.msra.mxu0 0.0
    %1079 = vmatprep.subr.mxu0 0.0
    %1080 = vmatpush1.xpose.msra.mxu0 0.0
    %1081 = vmatprep.subr.mxu0 0.0
    %1082 = vmatpush1.xpose.msra.mxu0 0.0
    %1083 = vmatprep.subr.mxu0 0.0
    %1084 = vmatpush1.xpose.msra.mxu0 0.0
    %1085 = vmatprep.subr.mxu0 0.0
    %1086 = vmatpush1.xpose.msra.mxu0 0.0
    %1087 = vmatprep.subr.mxu0 0.0
    %1088 = vmatpush1.xpose.msra.mxu0 0.0
    %1089 = vmatprep.subr.mxu0 0.0
    %1090 = vmatpush1.xpose.msra.mxu0 0.0
    %1091 = vmatprep.subr.mxu0 0.0
    %1092 = vmatpush1.xpose.msra.mxu0 0.0
    %1093 = vmatprep.subr.mxu0 0.0
    %1094 = vmatpush1.xpose.msra.mxu0 0.0
    %1095 = vmatprep.subr.mxu0 0.0
    %1096 = vmatpush1.xpose.msra.mxu0 0.0
    %1097 = vmatprep.subr.mxu0 0.0
    %1098 = vmatpush1.xpose.msra.mxu0 0.0
    %1099 = vmatprep.subr.mxu0 0.0
    %1100 = vmatpush1.xpose.msra.mxu0 0.0
    %1101 = vmatprep.subr.mxu0 0.0
    %1102 = vmatpush1.xpose.msra.mxu0 %v1071
    %1103 = vmatprep.subr.mxu0 0.0
    %1104 = vmatpush1.xpose.msra.mxu0 %v1068
    %1105 = vmatprep.subr.mxu0 0.0
    %1106 = vmatpush2.xpose.msra.mxu0 0.0
    %1107 = vmatprep.subr.mxu0 0.0
    %1108 = vmatpush2.xpose.msra.mxu0 0.0
    %1109 = vmatprep.subr.mxu0 0.0
    %1110 = vmatpush2.xpose.msra.mxu0 0.0
    %1111 = vmatprep.subr.mxu0 0.0
    %1112 = vmatpush2.xpose.msra.mxu0 0.0
    %1113 = vmatprep.subr.mxu0 0.0
    %1114 = vmatpush2.xpose.msra.mxu0 0.0
    %1115 = vmatprep.subr.mxu0 0.0
    %1116 = vmatpush2.xpose.msra.mxu0 0.0
    %1117 = vmatprep.subr.mxu0 0.0
    %1118 = vmatpush2.xpose.msra.mxu0 0.0
    %1119 = vmatprep.subr.mxu0 0.0
    %1120 = vmatpush2.xpose.msra.mxu0 0.0
    %1121 = vmatprep.subr.mxu0 0.0
    %1122 = vmatpush2.xpose.msra.mxu0 0.0
    %1123 = vmatprep.subr.mxu0 0.0
    %1124 = vmatpush2.xpose.msra.mxu0 0.0
    %1125 = vmatprep.subr.mxu0 0.0
    %1126 = vmatpush2.xpose.msra.mxu0 0.0
    %1127 = vmatprep.subr.mxu0 0.0
    %1128 = vmatpush2.xpose.msra.mxu0 0.0
    %1129 = vmatprep.subr.mxu0 0.0
    %1130 = vmatpush2.xpose.msra.mxu0 0.0
    %1131 = vmatprep.subr.mxu0 0.0
    %1132 = vmatpush2.xpose.msra.mxu0 0.0
    %1133 = vmatprep.subr.mxu0 0.0
    %1134 = vmatpush2.xpose.msra.mxu0 0.0
    %1135 = vmatprep.subr.mxu0 0.0
    %1136 = vmatpush2.xpose.msra.mxu0 0.0
    %1137 = vmatprep.mubr.f32.mxu0 0.0
    %1138 = vmatmul.mubr.f32.gmra.mxu0 %v1062
    %v1139 = vpop.f32.mrf.mxu0
    %v1140 = vadd.f32 %v1058, %v1139
    %v1141 = vpop.f32.mrf.mxu0
    %1142 = vmatprep.mubr.f32.mxu0 0.0
    %1143 = vmatmul.mubr.f32.gmra.mxu0 %v1065
    %v1144 = vpop.f32.mrf.mxu0
    %v1145 = vadd.f32 %v1059, %v1144
    %v1146 = vpop.f32.mrf.mxu0
    %1147 = vdwg.mxu0
    %v1149 = vsel %vm1060, %v779, 0
    %v1152 = vsel %vm1060, %v915, 0
    %v1155 = vsel %vm1060, %v783, 0
    %v1158 = vsel %vm1060, %v919, 0
    %1160 = vmatprep.subr.mxu0 0.0
    %1161 = vmatpush1.xpose.msra.mxu0 0.0
    %1162 = vmatprep.subr.mxu0 0.0
    %1163 = vmatpush1.xpose.msra.mxu0 0.0
    %1164 = vmatprep.subr.mxu0 0.0
    %1165 = vmatpush1.xpose.msra.mxu0 0.0
    %1166 = vmatprep.subr.mxu0 0.0
    %1167 = vmatpush1.xpose.msra.mxu0 0.0
    %1168 = vmatprep.subr.mxu0 0.0
    %1169 = vmatpush1.xpose.msra.mxu0 0.0
    %1170 = vmatprep.subr.mxu0 0.0
    %1171 = vmatpush1.xpose.msra.mxu0 0.0
    %1172 = vmatprep.subr.mxu0 0.0
    %1173 = vmatpush1.xpose.msra.mxu0 0.0
    %1174 = vmatprep.subr.mxu0 0.0
    %1175 = vmatpush1.xpose.msra.mxu0 0.0
    %1176 = vmatprep.subr.mxu0 0.0
    %1177 = vmatpush1.xpose.msra.mxu0 0.0
    %1178 = vmatprep.subr.mxu0 0.0
    %1179 = vmatpush1.xpose.msra.mxu0 0.0
    %1180 = vmatprep.subr.mxu0 0.0
    %1181 = vmatpush1.xpose.msra.mxu0 0.0
    %1182 = vmatprep.subr.mxu0 0.0
    %1183 = vmatpush1.xpose.msra.mxu0 0.0
    %1184 = vmatprep.subr.mxu0 0.0
    %1185 = vmatpush1.xpose.msra.mxu0 0.0
    %1186 = vmatprep.subr.mxu0 0.0
    %1187 = vmatpush1.xpose.msra.mxu0 0.0
    %1188 = vmatprep.subr.mxu0 0.0
    %1189 = vmatpush1.xpose.msra.mxu0 %v1158
    %1190 = vmatprep.subr.mxu0 0.0
    %1191 = vmatpush1.xpose.msra.mxu0 %v1155
    %1192 = vmatprep.subr.mxu0 0.0
    %1193 = vmatpush2.xpose.msra.mxu0 0.0
    %1194 = vmatprep.subr.mxu0 0.0
    %1195 = vmatpush2.xpose.msra.mxu0 0.0
    %1196 = vmatprep.subr.mxu0 0.0
    %1197 = vmatpush2.xpose.msra.mxu0 0.0
    %1198 = vmatprep.subr.mxu0 0.0
    %1199 = vmatpush2.xpose.msra.mxu0 0.0
    %1200 = vmatprep.subr.mxu0 0.0
    %1201 = vmatpush2.xpose.msra.mxu0 0.0
    %1202 = vmatprep.subr.mxu0 0.0
    %1203 = vmatpush2.xpose.msra.mxu0 0.0
    %1204 = vmatprep.subr.mxu0 0.0
    %1205 = vmatpush2.xpose.msra.mxu0 0.0
    %1206 = vmatprep.subr.mxu0 0.0
    %1207 = vmatpush2.xpose.msra.mxu0 0.0
    %1208 = vmatprep.subr.mxu0 0.0
    %1209 = vmatpush2.xpose.msra.mxu0 0.0
    %1210 = vmatprep.subr.mxu0 0.0
    %1211 = vmatpush2.xpose.msra.mxu0 0.0
    %1212 = vmatprep.subr.mxu0 0.0
    %1213 = vmatpush2.xpose.msra.mxu0 0.0
    %1214 = vmatprep.subr.mxu0 0.0
    %1215 = vmatpush2.xpose.msra.mxu0 0.0
    %1216 = vmatprep.subr.mxu0 0.0
    %1217 = vmatpush2.xpose.msra.mxu0 0.0
    %1218 = vmatprep.subr.mxu0 0.0
    %1219 = vmatpush2.xpose.msra.mxu0 0.0
    %1220 = vmatprep.subr.mxu0 0.0
    %1221 = vmatpush2.xpose.msra.mxu0 0.0
    %1222 = vmatprep.subr.mxu0 0.0
    %1223 = vmatpush2.xpose.msra.mxu0 0.0
    %1224 = vmatprep.mubr.f32.mxu0 0.0
    %1225 = vmatmul.mubr.f32.gmra.mxu0 %v1149
    %v1226 = vpop.f32.mrf.mxu0
    %v1227 = vadd.f32 %v1058, %v1226
    %v1228 = vpop.f32.mrf.mxu0
    %1229 = vmatprep.mubr.f32.mxu0 0.0
    %1230 = vmatmul.mubr.f32.gmra.mxu0 %v1152
    %v1231 = vpop.f32.mrf.mxu0
    %v1232 = vadd.f32 %v1059, %v1231
    %v1233 = vpop.f32.mrf.mxu0
    %1234 = vdwg.mxu0
    %v1236 = vsel %vm1060, %v780, 0
    %v1239 = vsel %vm1060, %v916, 0
    %v1242 = vsel %vm1060, %v784, 0
    %v1245 = vsel %vm1060, %v920, 0
    %1247 = vmatprep.subr.mxu0 0.0
    %1248 = vmatpush1.xpose.msra.mxu0 0.0
    %1249 = vmatprep.subr.mxu0 0.0
    %1250 = vmatpush1.xpose.msra.mxu0 0.0
    %1251 = vmatprep.subr.mxu0 0.0
    %1252 = vmatpush1.xpose.msra.mxu0 0.0
    %1253 = vmatprep.subr.mxu0 0.0
    %1254 = vmatpush1.xpose.msra.mxu0 0.0
    %1255 = vmatprep.subr.mxu0 0.0
    %1256 = vmatpush1.xpose.msra.mxu0 0.0
    %1257 = vmatprep.subr.mxu0 0.0
    %1258 = vmatpush1.xpose.msra.mxu0 0.0
    %1259 = vmatprep.subr.mxu0 0.0
    %1260 = vmatpush1.xpose.msra.mxu0 0.0
    %1261 = vmatprep.subr.mxu0 0.0
    %1262 = vmatpush1.xpose.msra.mxu0 0.0
    %1263 = vmatprep.subr.mxu0 0.0
    %1264 = vmatpush1.xpose.msra.mxu0 0.0
    %1265 = vmatprep.subr.mxu0 0.0
    %1266 = vmatpush1.xpose.msra.mxu0 0.0
    %1267 = vmatprep.subr.mxu0 0.0
    %1268 = vmatpush1.xpose.msra.mxu0 0.0
    %1269 = vmatprep.subr.mxu0 0.0
    %1270 = vmatpush1.xpose.msra.mxu0 0.0
    %1271 = vmatprep.subr.mxu0 0.0
    %1272 = vmatpush1.xpose.msra.mxu0 0.0
    %1273 = vmatprep.subr.mxu0 0.0
    %1274 = vmatpush1.xpose.msra.mxu0 0.0
    %1275 = vmatprep.subr.mxu0 0.0
    %1276 = vmatpush1.xpose.msra.mxu0 %v1245
    %1277 = vmatprep.subr.mxu0 0.0
    %1278 = vmatpush1.xpose.msra.mxu0 %v1242
    %1279 = vmatprep.subr.mxu0 0.0
    %1280 = vmatpush2.xpose.msra.mxu0 0.0
    %1281 = vmatprep.subr.mxu0 0.0
    %1282 = vmatpush2.xpose.msra.mxu0 0.0
    %1283 = vmatprep.subr.mxu0 0.0
    %1284 = vmatpush2.xpose.msra.mxu0 0.0
    %1285 = vmatprep.subr.mxu0 0.0
    %1286 = vmatpush2.xpose.msra.mxu0 0.0
    %1287 = vmatprep.subr.mxu0 0.0
    %1288 = vmatpush2.xpose.msra.mxu0 0.0
    %1289 = vmatprep.subr.mxu0 0.0
    %1290 = vmatpush2.xpose.msra.mxu0 0.0
    %1291 = vmatprep.subr.mxu0 0.0
    %1292 = vmatpush2.xpose.msra.mxu0 0.0
    %1293 = vmatprep.subr.mxu0 0.0
    %1294 = vmatpush2.xpose.msra.mxu0 0.0
    %1295 = vmatprep.subr.mxu0 0.0
    %1296 = vmatpush2.xpose.msra.mxu0 0.0
    %1297 = vmatprep.subr.mxu0 0.0
    %1298 = vmatpush2.xpose.msra.mxu0 0.0
    %1299 = vmatprep.subr.mxu0 0.0
    %1300 = vmatpush2.xpose.msra.mxu0 0.0
    %1301 = vmatprep.subr.mxu0 0.0
    %1302 = vmatpush2.xpose.msra.mxu0 0.0
    %1303 = vmatprep.subr.mxu0 0.0
    %1304 = vmatpush2.xpose.msra.mxu0 0.0
    %1305 = vmatprep.subr.mxu0 0.0
    %1306 = vmatpush2.xpose.msra.mxu0 0.0
    %1307 = vmatprep.subr.mxu0 0.0
    %1308 = vmatpush2.xpose.msra.mxu0 0.0
    %1309 = vmatprep.subr.mxu0 0.0
    %1310 = vmatpush2.xpose.msra.mxu0 0.0
    %1311 = vmatprep.mubr.f32.mxu0 0.0
    %1312 = vmatmul.mubr.f32.gmra.mxu0 %v1236
    %v1313 = vpop.f32.mrf.mxu0
    %v1314 = vadd.f32 %v1058, %v1313
    %v1315 = vpop.f32.mrf.mxu0
    %1316 = vmatprep.mubr.f32.mxu0 0.0
    %1317 = vmatmul.mubr.f32.gmra.mxu0 %v1239
    %v1318 = vpop.f32.mrf.mxu0
    %v1319 = vadd.f32 %v1059, %v1318
    %v1320 = vpop.f32.mrf.mxu0
    %1321 = vdwg.mxu0
    %v1323 = vsel %vm1060, %v781, 0
    %v1326 = vsel %vm1060, %v917, 0
    %v1329 = vsel %vm1060, %v785, 0
    %v1332 = vsel %vm1060, %v921, 0
    %1334 = vmatprep.subr.mxu0 0.0
    %1335 = vmatpush1.xpose.msra.mxu0 0.0
    %1336 = vmatprep.subr.mxu0 0.0
    %1337 = vmatpush1.xpose.msra.mxu0 0.0
    %1338 = vmatprep.subr.mxu0 0.0
    %1339 = vmatpush1.xpose.msra.mxu0 0.0
    %1340 = vmatprep.subr.mxu0 0.0
    %1341 = vmatpush1.xpose.msra.mxu0 0.0
    %1342 = vmatprep.subr.mxu0 0.0
    %1343 = vmatpush1.xpose.msra.mxu0 0.0
    %1344 = vmatprep.subr.mxu0 0.0
    %1345 = vmatpush1.xpose.msra.mxu0 0.0
    %1346 = vmatprep.subr.mxu0 0.0
    %1347 = vmatpush1.xpose.msra.mxu0 0.0
    %1348 = vmatprep.subr.mxu0 0.0
    %1349 = vmatpush1.xpose.msra.mxu0 0.0
    %1350 = vmatprep.subr.mxu0 0.0
    %1351 = vmatpush1.xpose.msra.mxu0 0.0
    %1352 = vmatprep.subr.mxu0 0.0
    %1353 = vmatpush1.xpose.msra.mxu0 0.0
    %1354 = vmatprep.subr.mxu0 0.0
    %1355 = vmatpush1.xpose.msra.mxu0 0.0
    %1356 = vmatprep.subr.mxu0 0.0
    %1357 = vmatpush1.xpose.msra.mxu0 0.0
    %1358 = vmatprep.subr.mxu0 0.0
    %1359 = vmatpush1.xpose.msra.mxu0 0.0
    %1360 = vmatprep.subr.mxu0 0.0
    %1361 = vmatpush1.xpose.msra.mxu0 0.0
    %1362 = vmatprep.subr.mxu0 0.0
    %1363 = vmatpush1.xpose.msra.mxu0 %v1332
    %1364 = vmatprep.subr.mxu0 0.0
    %1365 = vmatpush1.xpose.msra.mxu0 %v1329
    %1366 = vmatprep.subr.mxu0 0.0
    %1367 = vmatpush2.xpose.msra.mxu0 0.0
    %1368 = vmatprep.subr.mxu0 0.0
    %1369 = vmatpush2.xpose.msra.mxu0 0.0
    %1370 = vmatprep.subr.mxu0 0.0
    %1371 = vmatpush2.xpose.msra.mxu0 0.0
    %1372 = vmatprep.subr.mxu0 0.0
    %1373 = vmatpush2.xpose.msra.mxu0 0.0
    %1374 = vmatprep.subr.mxu0 0.0
    %1375 = vmatpush2.xpose.msra.mxu0 0.0
    %1376 = vmatprep.subr.mxu0 0.0
    %1377 = vmatpush2.xpose.msra.mxu0 0.0
    %1378 = vmatprep.subr.mxu0 0.0
    %1379 = vmatpush2.xpose.msra.mxu0 0.0
    %1380 = vmatprep.subr.mxu0 0.0
    %1381 = vmatpush2.xpose.msra.mxu0 0.0
    %1382 = vmatprep.subr.mxu0 0.0
    %1383 = vmatpush2.xpose.msra.mxu0 0.0
    %1384 = vmatprep.subr.mxu0 0.0
    %1385 = vmatpush2.xpose.msra.mxu0 0.0
    %1386 = vmatprep.subr.mxu0 0.0
    %1387 = vmatpush2.xpose.msra.mxu0 0.0
    %1388 = vmatprep.subr.mxu0 0.0
    %1389 = vmatpush2.xpose.msra.mxu0 0.0
    %1390 = vmatprep.subr.mxu0 0.0
    %1391 = vmatpush2.xpose.msra.mxu0 0.0
    %1392 = vmatprep.subr.mxu0 0.0
    %1393 = vmatpush2.xpose.msra.mxu0 0.0
    %1394 = vmatprep.subr.mxu0 0.0
    %1395 = vmatpush2.xpose.msra.mxu0 0.0
    %1396 = vmatprep.subr.mxu0 0.0
    %1397 = vmatpush2.xpose.msra.mxu0 0.0
    %1398 = vmatprep.mubr.f32.mxu0 0.0
    %1399 = vmatmul.mubr.f32.gmra.mxu0 %v1323
    %v1400 = vpop.f32.mrf.mxu0
    %v1401 = vadd.f32 %v1058, %v1400
    %v1402 = vpop.f32.mrf.mxu0
    %1403 = vmatprep.mubr.f32.mxu0 0.0
    %1404 = vmatmul.mubr.f32.gmra.mxu0 %v1326
    %v1405 = vpop.f32.mrf.mxu0
    %v1406 = vadd.f32 %v1059, %v1405
    %v1407 = vpop.f32.mrf.mxu0
    %1408 = vdwg.mxu0
    %vm1409 = vcmask 130048
    %v1410 = vsel %vm1409, %v1140, -inf
    %1411 = vmax.xlane.f32.xlu0 %v1410
    %v1412 = vpop.xlane.xlu0 %1411
    %v1413 = vsel %vm1409, %v1145, -inf
    %1414 = vmax.xlane.f32.xlu0 %v1413
    %v1415 = vpop.xlane.xlu0 %1414
    %v1416 = vsel %vm1409, %v1227, -inf
    %1417 = vmax.xlane.f32.xlu0 %v1416
    %v1418 = vpop.xlane.xlu0 %1417
    %v1419 = vsel %vm1409, %v1232, -inf
    %1420 = vmax.xlane.f32.xlu0 %v1419
    %v1421 = vpop.xlane.xlu0 %1420
    %v1422 = vsel %vm1409, %v1314, -inf
    %1423 = vmax.xlane.f32.xlu0 %v1422
    %v1424 = vpop.xlane.xlu0 %1423
    %v1425 = vsel %vm1409, %v1319, -inf
    %1426 = vmax.xlane.f32.xlu0 %v1425
    %v1427 = vpop.xlane.xlu0 %1426
    %v1428 = vsel %vm1409, %v1401, -inf
    %1429 = vmax.xlane.f32.xlu0 %v1428
    %v1430 = vpop.xlane.xlu0 %1429
    %v1431 = vsel %vm1409, %v1406, -inf
    %1432 = vmax.xlane.f32.xlu0 %v1431
    %v1433 = vpop.xlane.xlu0 %1432
    %v1434 = vsub.f32 %v1140, %v1412
    %v1435 = vsub.f32 %v1145, %v1415
    %v1436 = vsub.f32 %v1227, %v1418
    %v1437 = vsub.f32 %v1232, %v1421
    %v1438 = vsub.f32 %v1314, %v1424
    %v1439 = vsub.f32 %v1319, %v1427
    %v1440 = vsub.f32 %v1401, %v1430
    %v1441 = vsub.f32 %v1406, %v1433
    %v1442 = vmul.f32 %v1434, 1.442695
    %v1443 = vpow.pop %v1442
    %v1444 = vmul.f32 %v1435, 1.442695
    %v1445 = vpow.pop %v1444
    %v1446 = vmul.f32 %v1436, 1.442695
    %v1447 = vpow.pop %v1446
    %v1448 = vmul.f32 %v1437, 1.442695
    %v1449 = vpow.pop %v1448
    %v1450 = vmul.f32 %v1438, 1.442695
    %v1451 = vpow.pop %v1450
    %v1452 = vmul.f32 %v1439, 1.442695
    %v1453 = vpow.pop %v1452
    %v1454 = vmul.f32 %v1440, 1.442695
    %v1455 = vpow.pop %v1454
    %v1456 = vmul.f32 %v1441, 1.442695
    %v1457 = vpow.pop %v1456
    %v1458 = vsel %vm1409, %v1443, 0.0
    %1459 = vadd.xlane.f32.xlu0 %v1458
    %v1460 = vpop.xlane.xlu0 %1459
    %v1461 = vsel %vm1409, %v1445, 0.0
    %1462 = vadd.xlane.f32.xlu0 %v1461
    %v1463 = vpop.xlane.xlu0 %1462
    %v1464 = vsel %vm1409, %v1447, 0.0
    %1465 = vadd.xlane.f32.xlu0 %v1464
    %v1466 = vpop.xlane.xlu0 %1465
    %v1467 = vsel %vm1409, %v1449, 0.0
    %1468 = vadd.xlane.f32.xlu0 %v1467
    %v1469 = vpop.xlane.xlu0 %1468
    %v1470 = vsel %vm1409, %v1451, 0.0
    %1471 = vadd.xlane.f32.xlu0 %v1470
    %v1472 = vpop.xlane.xlu0 %1471
    %v1473 = vsel %vm1409, %v1453, 0.0
    %1474 = vadd.xlane.f32.xlu0 %v1473
    %v1475 = vpop.xlane.xlu0 %1474
    %v1476 = vsel %vm1409, %v1455, 0.0
    %1477 = vadd.xlane.f32.xlu0 %v1476
    %v1478 = vpop.xlane.xlu0 %1477
    %v1479 = vsel %vm1409, %v1457, 0.0
    %1480 = vadd.xlane.f32.xlu0 %v1479
    %v1481 = vpop.xlane.xlu0 %1480
    %v1482 = vrcp.pop %v1460
    %v1483 = vrcp.pop %v1463
    %v1484 = vrcp.pop %v1466
    %v1485 = vrcp.pop %v1469
    %v1486 = vrcp.pop %v1472
    %v1487 = vrcp.pop %v1475
    %v1488 = vrcp.pop %v1478
    %v1489 = vrcp.pop %v1481
    %v1490 = vmul.f32 %v1443, %v1482
    %v1491 = vmul.f32 %v1445, %v1483
    %v1492 = vmul.f32 %v1447, %v1484
    %v1493 = vmul.f32 %v1449, %v1485
    %v1494 = vmul.f32 %v1451, %v1486
    %v1495 = vmul.f32 %v1453, %v1487
    %v1496 = vmul.f32 %v1455, %v1488
    %v1497 = vmul.f32 %v1457, %v1489
    %v1499 = vsel %vm1409, %v1490, 0
    %v1502 = vsel %vm1409, %v1491, 0
    %1504 = vmatprep.subr.mxu0 0.0
    %1505 = vmatpush1.msra.mxu0 0.0
    %1506 = vmatprep.subr.mxu0 0.0
    %1507 = vmatpush1.msra.mxu0 0.0
    %1508 = vmatprep.subr.mxu0 0.0
    %1509 = vmatpush1.msra.mxu0 0.0
    %1510 = vmatprep.subr.mxu0 0.0
    %1511 = vmatpush1.msra.mxu0 0.0
    %1512 = vmatprep.subr.mxu0 0.0
    %1513 = vmatpush1.msra.mxu0 0.0
    %1514 = vmatprep.subr.mxu0 0.0
    %1515 = vmatpush1.msra.mxu0 0.0
    %1516 = vmatprep.subr.mxu0 0.0
    %1517 = vmatpush1.msra.mxu0 0.0
    %1518 = vmatprep.subr.mxu0 0.0
    %1519 = vmatpush1.msra.mxu0 0.0
    %1520 = vmatprep.subr.mxu0 0.0
    %1521 = vmatpush1.msra.mxu0 0.0
    %1522 = vmatprep.subr.mxu0 0.0
    %1523 = vmatpush1.msra.mxu0 0.0
    %1524 = vmatprep.subr.mxu0 0.0
    %1525 = vmatpush1.msra.mxu0 0.0
    %1526 = vmatprep.subr.mxu0 0.0
    %1527 = vmatpush1.msra.mxu0 0.0
    %1528 = vmatprep.subr.mxu0 0.0
    %1529 = vmatpush1.msra.mxu0 0.0
    %1530 = vmatprep.subr.mxu0 0.0
    %1531 = vmatpush1.msra.mxu0 0.0
    %1532 = vmatprep.subr.mxu0 0.0
    %1533 = vmatpush1.msra.mxu0 %v1054
    %1534 = vmatprep.subr.mxu0 0.0
    %1535 = vmatpush1.msra.mxu0 %v986
    %1536 = vmatprep.subr.mxu0 0.0
    %1537 = vmatpush2.msra.mxu0 0.0
    %1538 = vmatprep.subr.mxu0 0.0
    %1539 = vmatpush2.msra.mxu0 0.0
    %1540 = vmatprep.subr.mxu0 0.0
    %1541 = vmatpush2.msra.mxu0 0.0
    %1542 = vmatprep.subr.mxu0 0.0
    %1543 = vmatpush2.msra.mxu0 0.0
    %1544 = vmatprep.subr.mxu0 0.0
    %1545 = vmatpush2.msra.mxu0 0.0
    %1546 = vmatprep.subr.mxu0 0.0
    %1547 = vmatpush2.msra.mxu0 0.0
    %1548 = vmatprep.subr.mxu0 0.0
    %1549 = vmatpush2.msra.mxu0 0.0
    %1550 = vmatprep.subr.mxu0 0.0
    %1551 = vmatpush2.msra.mxu0 0.0
    %1552 = vmatprep.subr.mxu0 0.0
    %1553 = vmatpush2.msra.mxu0 0.0
    %1554 = vmatprep.subr.mxu0 0.0
    %1555 = vmatpush2.msra.mxu0 0.0
    %1556 = vmatprep.subr.mxu0 0.0
    %1557 = vmatpush2.msra.mxu0 0.0
    %1558 = vmatprep.subr.mxu0 0.0
    %1559 = vmatpush2.msra.mxu0 0.0
    %1560 = vmatprep.subr.mxu0 0.0
    %1561 = vmatpush2.msra.mxu0 0.0
    %1562 = vmatprep.subr.mxu0 0.0
    %1563 = vmatpush2.msra.mxu0 0.0
    %1564 = vmatprep.subr.mxu0 0.0
    %1565 = vmatpush2.msra.mxu0 0.0
    %1566 = vmatprep.subr.mxu0 0.0
    %1567 = vmatpush2.msra.mxu0 0.0
    %1568 = vmatprep.mubr.f32.mxu0 0.0
    %1569 = vmatmul.mubr.f32.gmra.mxu0 %v1499
    %v1570 = vpop.f32.mrf.mxu0
    %v1571 = vadd.f32 0.0, %v1570
    %v1572 = vpop.f32.mrf.mxu0
    %1573 = vmatprep.mubr.f32.mxu0 0.0
    %1574 = vmatmul.mubr.f32.gmra.mxu0 %v1502
    %v1575 = vpop.f32.mrf.mxu0
    %v1576 = vadd.f32 0.0, %v1575
    %v1577 = vpop.f32.mrf.mxu0
    %1578 = vdwg.mxu0
    %v1580 = vsel %vm1409, %v1492, 0
    %v1583 = vsel %vm1409, %v1493, 0
    %1585 = vmatprep.subr.mxu0 0.0
    %1586 = vmatpush1.msra.mxu0 0.0
    %1587 = vmatprep.subr.mxu0 0.0
    %1588 = vmatpush1.msra.mxu0 0.0
    %1589 = vmatprep.subr.mxu0 0.0
    %1590 = vmatpush1.msra.mxu0 0.0
    %1591 = vmatprep.subr.mxu0 0.0
    %1592 = vmatpush1.msra.mxu0 0.0
    %1593 = vmatprep.subr.mxu0 0.0
    %1594 = vmatpush1.msra.mxu0 0.0
    %1595 = vmatprep.subr.mxu0 0.0
    %1596 = vmatpush1.msra.mxu0 0.0
    %1597 = vmatprep.subr.mxu0 0.0
    %1598 = vmatpush1.msra.mxu0 0.0
    %1599 = vmatprep.subr.mxu0 0.0
    %1600 = vmatpush1.msra.mxu0 0.0
    %1601 = vmatprep.subr.mxu0 0.0
    %1602 = vmatpush1.msra.mxu0 0.0
    %1603 = vmatprep.subr.mxu0 0.0
    %1604 = vmatpush1.msra.mxu0 0.0
    %1605 = vmatprep.subr.mxu0 0.0
    %1606 = vmatpush1.msra.mxu0 0.0
    %1607 = vmatprep.subr.mxu0 0.0
    %1608 = vmatpush1.msra.mxu0 0.0
    %1609 = vmatprep.subr.mxu0 0.0
    %1610 = vmatpush1.msra.mxu0 0.0
    %1611 = vmatprep.subr.mxu0 0.0
    %1612 = vmatpush1.msra.mxu0 0.0
    %1613 = vmatprep.subr.mxu0 0.0
    %1614 = vmatpush1.msra.mxu0 %v1055
    %1615 = vmatprep.subr.mxu0 0.0
    %1616 = vmatpush1.msra.mxu0 %v987
    %1617 = vmatprep.subr.mxu0 0.0
    %1618 = vmatpush2.msra.mxu0 0.0
    %1619 = vmatprep.subr.mxu0 0.0
    %1620 = vmatpush2.msra.mxu0 0.0
    %1621 = vmatprep.subr.mxu0 0.0
    %1622 = vmatpush2.msra.mxu0 0.0
    %1623 = vmatprep.subr.mxu0 0.0
    %1624 = vmatpush2.msra.mxu0 0.0
    %1625 = vmatprep.subr.mxu0 0.0
    %1626 = vmatpush2.msra.mxu0 0.0
    %1627 = vmatprep.subr.mxu0 0.0
    %1628 = vmatpush2.msra.mxu0 0.0
    %1629 = vmatprep.subr.mxu0 0.0
    %1630 = vmatpush2.msra.mxu0 0.0
    %1631 = vmatprep.subr.mxu0 0.0
    %1632 = vmatpush2.msra.mxu0 0.0
    %1633 = vmatprep.subr.mxu0 0.0
    %1634 = vmatpush2.msra.mxu0 0.0
    %1635 = vmatprep.subr.mxu0 0.0
    %1636 = vmatpush2.msra.mxu0 0.0
    %1637 = vmatprep.subr.mxu0 0.0
    %1638 = vmatpush2.msra.mxu0 0.0
    %1639 = vmatprep.subr.mxu0 0.0
    %1640 = vmatpush2.msra.mxu0 0.0
    %1641 = vmatprep.subr.mxu0 0.0
    %1642 = vmatpush2.msra.mxu0 0.0
    %1643 = vmatprep.subr.mxu0 0.0
    %1644 = vmatpush2.msra.mxu0 0.0
    %1645 = vmatprep.subr.mxu0 0.0
    %1646 = vmatpush2.msra.mxu0 0.0
    %1647 = vmatprep.subr.mxu0 0.0
    %1648 = vmatpush2.msra.mxu0 0.0
    %1649 = vmatprep.mubr.f32.mxu0 0.0
    %1650 = vmatmul.mubr.f32.gmra.mxu0 %v1580
    %v1651 = vpop.f32.mrf.mxu0
    %v1652 = vadd.f32 0.0, %v1651
    %v1653 = vpop.f32.mrf.mxu0
    %1654 = vmatprep.mubr.f32.mxu0 0.0
    %1655 = vmatmul.mubr.f32.gmra.mxu0 %v1583
    %v1656 = vpop.f32.mrf.mxu0
    %v1657 = vadd.f32 0.0, %v1656
    %v1658 = vpop.f32.mrf.mxu0
    %1659 = vdwg.mxu0
    %v1661 = vsel %vm1409, %v1494, 0
    %v1664 = vsel %vm1409, %v1495, 0
    %1666 = vmatprep.subr.mxu0 0.0
    %1667 = vmatpush1.msra.mxu0 0.0
    %1668 = vmatprep.subr.mxu0 0.0
    %1669 = vmatpush1.msra.mxu0 0.0
    %1670 = vmatprep.subr.mxu0 0.0
    %1671 = vmatpush1.msra.mxu0 0.0
    %1672 = vmatprep.subr.mxu0 0.0
    %1673 = vmatpush1.msra.mxu0 0.0
    %1674 = vmatprep.subr.mxu0 0.0
    %1675 = vmatpush1.msra.mxu0 0.0
    %1676 = vmatprep.subr.mxu0 0.0
    %1677 = vmatpush1.msra.mxu0 0.0
    %1678 = vmatprep.subr.mxu0 0.0
    %1679 = vmatpush1.msra.mxu0 0.0
    %1680 = vmatprep.subr.mxu0 0.0
    %1681 = vmatpush1.msra.mxu0 0.0
    %1682 = vmatprep.subr.mxu0 0.0
    %1683 = vmatpush1.msra.mxu0 0.0
    %1684 = vmatprep.subr.mxu0 0.0
    %1685 = vmatpush1.msra.mxu0 0.0
    %1686 = vmatprep.subr.mxu0 0.0
    %1687 = vmatpush1.msra.mxu0 0.0
    %1688 = vmatprep.subr.mxu0 0.0
    %1689 = vmatpush1.msra.mxu0 0.0
    %1690 = vmatprep.subr.mxu0 0.0
    %1691 = vmatpush1.msra.mxu0 0.0
    %1692 = vmatprep.subr.mxu0 0.0
    %1693 = vmatpush1.msra.mxu0 0.0
    %1694 = vmatprep.subr.mxu0 0.0
    %1695 = vmatpush1.msra.mxu0 %v1056
    %1696 = vmatprep.subr.mxu0 0.0
    %1697 = vmatpush1.msra.mxu0 %v988
    %1698 = vmatprep.subr.mxu0 0.0
    %1699 = vmatpush2.msra.mxu0 0.0
    %1700 = vmatprep.subr.mxu0 0.0
    %1701 = vmatpush2.msra.mxu0 0.0
    %1702 = vmatprep.subr.mxu0 0.0
    %1703 = vmatpush2.msra.mxu0 0.0
    %1704 = vmatprep.subr.mxu0 0.0
    %1705 = vmatpush2.msra.mxu0 0.0
    %1706 = vmatprep.subr.mxu0 0.0
    %1707 = vmatpush2.msra.mxu0 0.0
    %1708 = vmatprep.subr.mxu0 0.0
    %1709 = vmatpush2.msra.mxu0 0.0
    %1710 = vmatprep.subr.mxu0 0.0
    %1711 = vmatpush2.msra.mxu0 0.0
    %1712 = vmatprep.subr.mxu0 0.0
    %1713 = vmatpush2.msra.mxu0 0.0
    %1714 = vmatprep.subr.mxu0 0.0
    %1715 = vmatpush2.msra.mxu0 0.0
    %1716 = vmatprep.subr.mxu0 0.0
    %1717 = vmatpush2.msra.mxu0 0.0
    %1718 = vmatprep.subr.mxu0 0.0
    %1719 = vmatpush2.msra.mxu0 0.0
    %1720 = vmatprep.subr.mxu0 0.0
    %1721 = vmatpush2.msra.mxu0 0.0
    %1722 = vmatprep.subr.mxu0 0.0
    %1723 = vmatpush2.msra.mxu0 0.0
    %1724 = vmatprep.subr.mxu0 0.0
    %1725 = vmatpush2.msra.mxu0 0.0
    %1726 = vmatprep.subr.mxu0 0.0
    %1727 = vmatpush2.msra.mxu0 0.0
    %1728 = vmatprep.subr.mxu0 0.0
    %1729 = vmatpush2.msra.mxu0 0.0
    %1730 = vmatprep.mubr.f32.mxu0 0.0
    %1731 = vmatmul.mubr.f32.gmra.mxu0 %v1661
    %v1732 = vpop.f32.mrf.mxu0
    %v1733 = vadd.f32 0.0, %v1732
    %v1734 = vpop.f32.mrf.mxu0
    %1735 = vmatprep.mubr.f32.mxu0 0.0
    %1736 = vmatmul.mubr.f32.gmra.mxu0 %v1664
    %v1737 = vpop.f32.mrf.mxu0
    %v1738 = vadd.f32 0.0, %v1737
    %v1739 = vpop.f32.mrf.mxu0
    %1740 = vdwg.mxu0
    %v1742 = vsel %vm1409, %v1496, 0
    %v1745 = vsel %vm1409, %v1497, 0
    %1747 = vmatprep.subr.mxu0 0.0
    %1748 = vmatpush1.msra.mxu0 0.0
    %1749 = vmatprep.subr.mxu0 0.0
    %1750 = vmatpush1.msra.mxu0 0.0
    %1751 = vmatprep.subr.mxu0 0.0
    %1752 = vmatpush1.msra.mxu0 0.0
    %1753 = vmatprep.subr.mxu0 0.0
    %1754 = vmatpush1.msra.mxu0 0.0
    %1755 = vmatprep.subr.mxu0 0.0
    %1756 = vmatpush1.msra.mxu0 0.0
    %1757 = vmatprep.subr.mxu0 0.0
    %1758 = vmatpush1.msra.mxu0 0.0
    %1759 = vmatprep.subr.mxu0 0.0
    %1760 = vmatpush1.msra.mxu0 0.0
    %1761 = vmatprep.subr.mxu0 0.0
    %1762 = vmatpush1.msra.mxu0 0.0
    %1763 = vmatprep.subr.mxu0 0.0
    %1764 = vmatpush1.msra.mxu0 0.0
    %1765 = vmatprep.subr.mxu0 0.0
    %1766 = vmatpush1.msra.mxu0 0.0
    %1767 = vmatprep.subr.mxu0 0.0
    %1768 = vmatpush1.msra.mxu0 0.0
    %1769 = vmatprep.subr.mxu0 0.0
    %1770 = vmatpush1.msra.mxu0 0.0
    %1771 = vmatprep.subr.mxu0 0.0
    %1772 = vmatpush1.msra.mxu0 0.0
    %1773 = vmatprep.subr.mxu0 0.0
    %1774 = vmatpush1.msra.mxu0 0.0
    %1775 = vmatprep.subr.mxu0 0.0
    %1776 = vmatpush1.msra.mxu0 %v1057
    %1777 = vmatprep.subr.mxu0 0.0
    %1778 = vmatpush1.msra.mxu0 %v989
    %1779 = vmatprep.subr.mxu0 0.0
    %1780 = vmatpush2.msra.mxu0 0.0
    %1781 = vmatprep.subr.mxu0 0.0
    %1782 = vmatpush2.msra.mxu0 0.0
    %1783 = vmatprep.subr.mxu0 0.0
    %1784 = vmatpush2.msra.mxu0 0.0
    %1785 = vmatprep.subr.mxu0 0.0
    %1786 = vmatpush2.msra.mxu0 0.0
    %1787 = vmatprep.subr.mxu0 0.0
    %1788 = vmatpush2.msra.mxu0 0.0
    %1789 = vmatprep.subr.mxu0 0.0
    %1790 = vmatpush2.msra.mxu0 0.0
    %1791 = vmatprep.subr.mxu0 0.0
    %1792 = vmatpush2.msra.mxu0 0.0
    %1793 = vmatprep.subr.mxu0 0.0
    %1794 = vmatpush2.msra.mxu0 0.0
    %1795 = vmatprep.subr.mxu0 0.0
    %1796 = vmatpush2.msra.mxu0 0.0
    %1797 = vmatprep.subr.mxu0 0.0
    %1798 = vmatpush2.msra.mxu0 0.0
    %1799 = vmatprep.subr.mxu0 0.0
    %1800 = vmatpush2.msra.mxu0 0.0
    %1801 = vmatprep.subr.mxu0 0.0
    %1802 = vmatpush2.msra.mxu0 0.0
    %1803 = vmatprep.subr.mxu0 0.0
    %1804 = vmatpush2.msra.mxu0 0.0
    %1805 = vmatprep.subr.mxu0 0.0
    %1806 = vmatpush2.msra.mxu0 0.0
    %1807 = vmatprep.subr.mxu0 0.0
    %1808 = vmatpush2.msra.mxu0 0.0
    %1809 = vmatprep.subr.mxu0 0.0
    %1810 = vmatpush2.msra.mxu0 0.0
    %1811 = vmatprep.mubr.f32.mxu0 0.0
    %1812 = vmatmul.mubr.f32.gmra.mxu0 %v1742
    %v1813 = vpop.f32.mrf.mxu0
    %v1814 = vadd.f32 0.0, %v1813
    %v1815 = vpop.f32.mrf.mxu0
    %1816 = vmatprep.mubr.f32.mxu0 0.0
    %1817 = vmatmul.mubr.f32.gmra.mxu0 %v1745
    %v1818 = vpop.f32.mrf.mxu0
    %v1819 = vadd.f32 0.0, %v1818
    %v1820 = vpop.f32.mrf.mxu0
    %1821 = vdwg.mxu0
    %v1822 = vcombine.low %v1571, %v1733
    %v1823 = vcombine.high %v1571, %v1733
    %v1825 = vunpack.c.l.s4 1983009808
    %v1826 = vunpack.c.0.s8 %v1825
    %v1827 = vlaneseq
    %v1828 = vshrl.u32 %v1827, 7
    %v1829 = vsub.s32 %v1826, %v1828
    %v1830 = vrot.slane %v1822, %v1829
    %v1832 = vunpack.c.l.s4 1983009808
    %v1833 = vunpack.c.0.s8 %v1832
    %v1834 = vlaneseq
    %v1835 = vshrl.u32 %v1834, 7
    %v1836 = vsub.s32 %v1833, %v1835
    %v1837 = vrot.slane %v1823, %v1836
    %v1838 = vcombine.low %v1652, %v1814
    %v1839 = vcombine.high %v1652, %v1814
    %v1841 = vunpack.c.l.s4 1983009808
    %v1842 = vunpack.c.0.s8 %v1841
    %v1843 = vlaneseq
    %v1844 = vshrl.u32 %v1843, 7
    %v1845 = vsub.s32 %v1842, %v1844
    %v1846 = vrot.slane %v1838, %v1845
    %v1848 = vunpack.c.l.s4 1983009808
    %v1849 = vunpack.c.0.s8 %v1848
    %v1850 = vlaneseq
    %v1851 = vshrl.u32 %v1850, 7
    %v1852 = vsub.s32 %v1849, %v1851
    %v1853 = vrot.slane %v1839, %v1852
    %v1854 = vcombine.low %v1830, %v1846
    %v1855 = vcombine.high %v1830, %v1846
    %v1857 = vunpack.c.l.s4 1934713408
    %v1858 = vunpack.c.0.s8 %v1857
    %v1859 = vlaneseq
    %v1860 = vshrl.u32 %v1859, 7
    %v1861 = vsub.s32 %v1858, %v1860
    %v1862 = vrot.slane %v1854, %v1861
    %v1864 = vunpack.c.l.s4 1934713408
    %v1865 = vunpack.c.0.s8 %v1864
    %v1866 = vlaneseq
    %v1867 = vshrl.u32 %v1866, 7
    %v1868 = vsub.s32 %v1865, %v1867
    %v1869 = vrot.slane %v1855, %v1868
    %v1870 = vcombine.low %v1837, %v1853
    %v1871 = vcombine.high %v1837, %v1853
    %v1873 = vunpack.c.l.s4 1934713408
    %v1874 = vunpack.c.0.s8 %v1873
    %v1875 = vlaneseq
    %v1876 = vshrl.u32 %v1875, 7
    %v1877 = vsub.s32 %v1874, %v1876
    %v1878 = vrot.slane %v1870, %v1877
    %v1880 = vunpack.c.l.s4 1934713408
    %v1881 = vunpack.c.0.s8 %v1880
    %v1882 = vlaneseq
    %v1883 = vshrl.u32 %v1882, 7
    %v1884 = vsub.s32 %v1881, %v1883
    %v1885 = vrot.slane %v1871, %v1884
    %v1886 = vcombine.high %v1862, 0.0
    %v1887 = vcombine.high %v1869, 0.0
    %v1888 = vcombine.high %v1878, 0.0
    %v1889 = vcombine.high %v1885, 0.0
    %v1890 = vcombine.low %v1576, %v1738
    %v1891 = vcombine.high %v1576, %v1738
    %v1893 = vunpack.c.l.s4 1983009808
    %v1894 = vunpack.c.0.s8 %v1893
    %v1895 = vlaneseq
    %v1896 = vshrl.u32 %v1895, 7
    %v1897 = vsub.s32 %v1894, %v1896
    %v1898 = vrot.slane %v1890, %v1897
    %v1900 = vunpack.c.l.s4 1983009808
    %v1901 = vunpack.c.0.s8 %v1900
    %v1902 = vlaneseq
    %v1903 = vshrl.u32 %v1902, 7
    %v1904 = vsub.s32 %v1901, %v1903
    %v1905 = vrot.slane %v1891, %v1904
    %v1906 = vcombine.low %v1657, %v1819
    %v1907 = vcombine.high %v1657, %v1819
    %v1909 = vunpack.c.l.s4 1983009808
    %v1910 = vunpack.c.0.s8 %v1909
    %v1911 = vlaneseq
    %v1912 = vshrl.u32 %v1911, 7
    %v1913 = vsub.s32 %v1910, %v1912
    %v1914 = vrot.slane %v1906, %v1913
    %v1916 = vunpack.c.l.s4 1983009808
    %v1917 = vunpack.c.0.s8 %v1916
    %v1918 = vlaneseq
    %v1919 = vshrl.u32 %v1918, 7
    %v1920 = vsub.s32 %v1917, %v1919
    %v1921 = vrot.slane %v1907, %v1920
    %v1922 = vcombine.low %v1898, %v1914
    %v1923 = vcombine.high %v1898, %v1914
    %v1925 = vunpack.c.l.s4 1934713408
    %v1926 = vunpack.c.0.s8 %v1925
    %v1927 = vlaneseq
    %v1928 = vshrl.u32 %v1927, 7
    %v1929 = vsub.s32 %v1926, %v1928
    %v1930 = vrot.slane %v1922, %v1929
    %v1932 = vunpack.c.l.s4 1934713408
    %v1933 = vunpack.c.0.s8 %v1932
    %v1934 = vlaneseq
    %v1935 = vshrl.u32 %v1934, 7
    %v1936 = vsub.s32 %v1933, %v1935
    %v1937 = vrot.slane %v1923, %v1936
    %v1938 = vcombine.low %v1905, %v1921
    %v1939 = vcombine.high %v1905, %v1921
    %v1941 = vunpack.c.l.s4 1934713408
    %v1942 = vunpack.c.0.s8 %v1941
    %v1943 = vlaneseq
    %v1944 = vshrl.u32 %v1943, 7
    %v1945 = vsub.s32 %v1942, %v1944
    %v1946 = vrot.slane %v1938, %v1945
    %v1948 = vunpack.c.l.s4 1934713408
    %v1949 = vunpack.c.0.s8 %v1948
    %v1950 = vlaneseq
    %v1951 = vshrl.u32 %v1950, 7
    %v1952 = vsub.s32 %v1949, %v1951
    %v1953 = vrot.slane %v1939, %v1952
    %v1954 = vcombine.high %v1930, 0.0
    %v1955 = vcombine.high %v1937, 0.0
    %v1956 = vcombine.high %v1946, 0.0
    %v1957 = vcombine.high %v1953, 0.0
    %v1958 = vcombine.low %v1862, %v1869
    %v1960 = vunpack.c.l.s4 1983009808
    %v1961 = vunpack.c.0.s8 %v1960
    %v1962 = vlaneseq
    %v1963 = vshrl.u32 %v1962, 7
    %v1964 = vsub.s32 %v1961, %v1963
    %v1965 = vrot.slane %v1958, %v1964
    %v1966 = vcombine.low %v1886, %v1887
    %v1968 = vunpack.c.l.s4 1983009808
    %v1969 = vunpack.c.0.s8 %v1968
    %v1970 = vlaneseq
    %v1971 = vshrl.u32 %v1970, 7
    %v1972 = vsub.s32 %v1969, %v1971
    %v1973 = vrot.slane %v1966, %v1972
    %v1974 = vcombine.low %v1878, %v1885
    %v1976 = vunpack.c.l.s4 1983009808
    %v1977 = vunpack.c.0.s8 %v1976
    %v1978 = vlaneseq
    %v1979 = vshrl.u32 %v1978, 7
    %v1980 = vsub.s32 %v1977, %v1979
    %v1981 = vrot.slane %v1974, %v1980
    %v1982 = vcombine.low %v1888, %v1889
    %v1984 = vunpack.c.l.s4 1983009808
    %v1985 = vunpack.c.0.s8 %v1984
    %v1986 = vlaneseq
    %v1987 = vshrl.u32 %v1986, 7
    %v1988 = vsub.s32 %v1985, %v1987
    %v1989 = vrot.slane %v1982, %v1988
    %v1990 = vcombine.low %v1965, %v1973
    %v1991 = vcombine.high %v1965, %v1973
    %v1993 = vunpack.c.l.s4 1934713408
    %v1994 = vunpack.c.0.s8 %v1993
    %v1995 = vlaneseq
    %v1996 = vshrl.u32 %v1995, 7
    %v1997 = vsub.s32 %v1994, %v1996
    %v1998 = vrot.slane %v1990, %v1997
    %v2000 = vunpack.c.l.s4 1934713408
    %v2001 = vunpack.c.0.s8 %v2000
    %v2002 = vlaneseq
    %v2003 = vshrl.u32 %v2002, 7
    %v2004 = vsub.s32 %v2001, %v2003
    %v2005 = vrot.slane %v1991, %v2004
    %v2006 = vcombine.low %v1981, %v1989
    %v2007 = vcombine.high %v1981, %v1989
    %v2009 = vunpack.c.l.s4 1934713408
    %v2010 = vunpack.c.0.s8 %v2009
    %v2011 = vlaneseq
    %v2012 = vshrl.u32 %v2011, 7
    %v2013 = vsub.s32 %v2010, %v2012
    %v2014 = vrot.slane %v2006, %v2013
    %v2016 = vunpack.c.l.s4 1934713408
    %v2017 = vunpack.c.0.s8 %v2016
    %v2018 = vlaneseq
    %v2019 = vshrl.u32 %v2018, 7
    %v2020 = vsub.s32 %v2017, %v2019
    %v2021 = vrot.slane %v2007, %v2020
    %v2022 = vcombine.low %v1998, %v2014
    %v2023 = vcombine.high %v1998, %v2014
    %v2024 = vcombine.low %v2005, %v2021
    %v2025 = vcombine.high %v2005, %v2021
    %v2026 = vcombine.low %v1930, %v1937
    %v2028 = vunpack.c.l.s4 1983009808
    %v2029 = vunpack.c.0.s8 %v2028
    %v2030 = vlaneseq
    %v2031 = vshrl.u32 %v2030, 7
    %v2032 = vsub.s32 %v2029, %v2031
    %v2033 = vrot.slane %v2026, %v2032
    %v2034 = vcombine.low %v1954, %v1955
    %v2036 = vunpack.c.l.s4 1983009808
    %v2037 = vunpack.c.0.s8 %v2036
    %v2038 = vlaneseq
    %v2039 = vshrl.u32 %v2038, 7
    %v2040 = vsub.s32 %v2037, %v2039
    %v2041 = vrot.slane %v2034, %v2040
    %v2042 = vcombine.low %v1946, %v1953
    %v2044 = vunpack.c.l.s4 1983009808
    %v2045 = vunpack.c.0.s8 %v2044
    %v2046 = vlaneseq
    %v2047 = vshrl.u32 %v2046, 7
    %v2048 = vsub.s32 %v2045, %v2047
    %v2049 = vrot.slane %v2042, %v2048
    %v2050 = vcombine.low %v1956, %v1957
    %v2052 = vunpack.c.l.s4 1983009808
    %v2053 = vunpack.c.0.s8 %v2052
    %v2054 = vlaneseq
    %v2055 = vshrl.u32 %v2054, 7
    %v2056 = vsub.s32 %v2053, %v2055
    %v2057 = vrot.slane %v2050, %v2056
    %v2058 = vcombine.low %v2033, %v2041
    %v2059 = vcombine.high %v2033, %v2041
    %v2061 = vunpack.c.l.s4 1934713408
    %v2062 = vunpack.c.0.s8 %v2061
    %v2063 = vlaneseq
    %v2064 = vshrl.u32 %v2063, 7
    %v2065 = vsub.s32 %v2062, %v2064
    %v2066 = vrot.slane %v2058, %v2065
    %v2068 = vunpack.c.l.s4 1934713408
    %v2069 = vunpack.c.0.s8 %v2068
    %v2070 = vlaneseq
    %v2071 = vshrl.u32 %v2070, 7
    %v2072 = vsub.s32 %v2069, %v2071
    %v2073 = vrot.slane %v2059, %v2072
    %v2074 = vcombine.low %v2049, %v2057
    %v2075 = vcombine.high %v2049, %v2057
    %v2077 = vunpack.c.l.s4 1934713408
    %v2078 = vunpack.c.0.s8 %v2077
    %v2079 = vlaneseq
    %v2080 = vshrl.u32 %v2079, 7
    %v2081 = vsub.s32 %v2078, %v2080
    %v2082 = vrot.slane %v2074, %v2081
    %v2084 = vunpack.c.l.s4 1934713408
    %v2085 = vunpack.c.0.s8 %v2084
    %v2086 = vlaneseq
    %v2087 = vshrl.u32 %v2086, 7
    %v2088 = vsub.s32 %v2085, %v2087
    %v2089 = vrot.slane %v2075, %v2088
    %v2090 = vcombine.low %v2066, %v2082
    %v2091 = vcombine.high %v2066, %v2082
    %v2092 = vcombine.low %v2073, %v2089
    %v2093 = vcombine.high %v2073, %v2089
    %2096 = vrot.lane.b32.xlu0 %v2023, 8
    %v2097 = vpop.permute.xlu0 %2096
    %2098 = vrot.lane.b32.xlu0 %v2091, 8
    %v2099 = vpop.permute.xlu0 %2098
    %2104 = vrot.lane.b32.xlu0 %v2024, 16
    %v2105 = vpop.permute.xlu0 %2104
    %2106 = vrot.lane.b32.xlu0 %v2092, 16
    %v2107 = vpop.permute.xlu0 %2106
    %2112 = vrot.lane.b32.xlu0 %v2025, 24
    %v2113 = vpop.permute.xlu0 %2112
    %2114 = vrot.lane.b32.xlu0 %v2093, 24
    %v2115 = vpop.permute.xlu0 %2114
    %v2118 = vsel %vm1060, %v2022, %v2097
    %v2119 = vsel %vm1060, %v2090, %v2099
    %v2120 = vsel %vm1409, %v2118, %v2105
    %v2121 = vsel %vm1409, %v2119, %v2107
    %vm2122 = vcmask 195584
    %v2123 = vsel %vm2122, %v2120, %v2113
    %v2124 = vsel %vm2122, %v2121, %v2115
    %v2125 = vld [vmem:[#allocation7] sm:$0xff]
    %v2126 = vld [vmem:[#allocation7 + $0x8] sm:$0xff]
    %v2127 = vld [vmem:[#allocation7 + $0x10] sm:$0xff]
    %v2128 = vld [vmem:[#allocation7 + $0x18] sm:$0xff]
    %v2129 = vld [vmem:[%s4] sm:$0x1]
    %v2131 = vlaneseq
    %v2132 = vshrl.u32 %v2131, 7
    %v2133 = vsub.s32 0, %v2132
    %v2134 = vrot.slane %v2129, %v2133
    %v2137 = vsel %vm92, %v2123, 0
    %v2140 = vsel %vm92, %v2124, 0
    %2142 = vmatprep.subr.mxu0 0.0
    %2143 = vmatpush1.msra.mxu0 0.0
    %2144 = vmatprep.subr.mxu0 0.0
    %2145 = vmatpush1.msra.mxu0 0.0
    %2146 = vmatprep.subr.mxu0 0.0
    %2147 = vmatpush1.msra.mxu0 0.0
    %2148 = vmatprep.subr.mxu0 0.0
    %2149 = vmatpush1.msra.mxu0 0.0
    %2150 = vmatprep.subr.mxu0 0.0
    %2151 = vmatpush1.msra.mxu0 0.0
    %2152 = vmatprep.subr.mxu0 0.0
    %2153 = vmatpush1.msra.mxu0 0.0
    %2154 = vmatprep.subr.mxu0 0.0
    %2155 = vmatpush1.msra.mxu0 0.0
    %2156 = vmatprep.subr.mxu0 0.0
    %2157 = vmatpush1.msra.mxu0 0.0
    %2158 = vmatprep.subr.mxu0 0.0
    %2159 = vmatpush1.msra.mxu0 0.0
    %2160 = vmatprep.subr.mxu0 0.0
    %2161 = vmatpush1.msra.mxu0 0.0
    %2162 = vmatprep.subr.mxu0 0.0
    %2163 = vmatpush1.msra.mxu0 0.0
    %2164 = vmatprep.subr.mxu0 0.0
    %2165 = vmatpush1.msra.mxu0 0.0
    %2166 = vmatprep.subr.mxu0 0.0
    %2167 = vmatpush1.msra.mxu0 %v2128
    %2168 = vmatprep.subr.mxu0 0.0
    %2169 = vmatpush1.msra.mxu0 %v2127
    %2170 = vmatprep.subr.mxu0 0.0
    %2171 = vmatpush1.msra.mxu0 %v2126
    %2172 = vmatprep.subr.mxu0 0.0
    %2173 = vmatpush1.msra.mxu0 %v2125
    %2174 = vmatprep.subr.mxu0 0.0
    %2175 = vmatpush2.msra.mxu0 0.0
    %2176 = vmatprep.subr.mxu0 0.0
    %2177 = vmatpush2.msra.mxu0 0.0
    %2178 = vmatprep.subr.mxu0 0.0
    %2179 = vmatpush2.msra.mxu0 0.0
    %2180 = vmatprep.subr.mxu0 0.0
    %2181 = vmatpush2.msra.mxu0 0.0
    %2182 = vmatprep.subr.mxu0 0.0
    %2183 = vmatpush2.msra.mxu0 0.0
    %2184 = vmatprep.subr.mxu0 0.0
    %2185 = vmatpush2.msra.mxu0 0.0
    %2186 = vmatprep.subr.mxu0 0.0
    %2187 = vmatpush2.msra.mxu0 0.0
    %2188 = vmatprep.subr.mxu0 0.0
    %2189 = vmatpush2.msra.mxu0 0.0
    %2190 = vmatprep.subr.mxu0 0.0
    %2191 = vmatpush2.msra.mxu0 0.0
    %2192 = vmatprep.subr.mxu0 0.0
    %2193 = vmatpush2.msra.mxu0 0.0
    %2194 = vmatprep.subr.mxu0 0.0
    %2195 = vmatpush2.msra.mxu0 0.0
    %2196 = vmatprep.subr.mxu0 0.0
    %2197 = vmatpush2.msra.mxu0 0.0
    %2198 = vmatprep.subr.mxu0 0.0
    %2199 = vmatpush2.msra.mxu0 0.0
    %2200 = vmatprep.subr.mxu0 0.0
    %2201 = vmatpush2.msra.mxu0 0.0
    %2202 = vmatprep.subr.mxu0 0.0
    %2203 = vmatpush2.msra.mxu0 0.0
    %2204 = vmatprep.subr.mxu0 0.0
    %2205 = vmatpush2.msra.mxu0 0.0
    %2206 = vmatprep.mubr.f32.mxu0 0.0
    %2207 = vmatmul.mubr.f32.gmra.mxu0 %v2137
    %v2208 = vpop.f32.mrf.mxu0
    %v2209 = vadd.f32 %v2134, %v2208
    %v2210 = vpop.f32.mrf.mxu0
    %2211 = vmatprep.mubr.f32.mxu0 0.0
    %2212 = vmatmul.mubr.f32.gmra.mxu0 %v2140
    %v2213 = vpop.f32.mrf.mxu0
    %v2214 = vadd.f32 %v2134, %v2213
    %v2215 = vpop.f32.mrf.mxu0
    %2216 = vdwg.mxu0
    %2217 = vst.msk [vmem:[#allocation10] sm:$0xff] %vm92, %v2209
    %2218 = vst.msk [vmem:[#allocation10 + $0x8] sm:$0xff] %vm92, %v2214
    // Predicated region
    $region42: #{tpu_custom_call.1} parent=1 // pred_check
      _
    $region43: #{tpu_custom_call.1} parent=1 // pred_check_branch
      %2220 = sbr.rel (0) target = $region45
    $region44: #{tpu_custom_call.1} parent=1 // pred_region
      %s2222 = ssub.s32 256, 256
      %2223 = vsyncadd [#allocation4], %s2222
      %s2224 = sshll.u32 [#allocation10], 4
      %s2225 = int_to_ptr.vmem [resolvable:$true] %s2224
      %2230 = dma.vmem_to_hbm [thread:$0]  %s2225, 256, %s6, [#allocation4], 128, 128, 8
    $region45: #{tpu_custom_call.1} parent=1 // pred_fallthru
      _
    // Predicated region
    $region46: #{tpu_custom_call.1} parent=1 // pred_check
      _
    $region47: #{tpu_custom_call.1} parent=1 // pred_check_branch
      %2232 = sbr.rel (0) target = $region49
    $region48: #{tpu_custom_call.1} parent=1 // pred_region
      %2233 = dma.done [#allocation4], 256
    $region49: #{tpu_custom_call.1} parent=1 // pred_fallthru
      _
    %2234 = vsyncpa [#allocation3], 1
    %2235 = vsyncpa [#allocation6], 1
    %2236 = vsyncpa [#allocation9], 1
    %2237 = vsyncpa [#allocation4], 1

</llo_original>
